<compile_context>
chip_gen: v6e
topology: v6e:2x2x1
jax: 0.10.0
libtpu: 0.0.40
codegen_flags: <defaults>
</compile_context>

<pallas_src>
import functools

import jax
import jax.numpy as jnp
from jax.experimental import pallas as pl
from jax.experimental.pallas import tpu as pltpu


def _sigmoid(x):
    # Exact sigmoid (EUP exp + divide).  pl.reciprocal(..., approx=True) would
    # push the divide onto the EUP slot too, at a small accuracy cost; kept
    # exact so the f32 reference check stays tight.
    return 1.0 / (1.0 + jnp.exp(-x))


# ----------------------------------------------------------------------------
# Fused CabNet kernel: one grid step == one batch *chunk* of `bc` images fused
# on the lane axis (bc == B on v5e/v6e, bc == B/2 on v7x).
# Refs (all f32):
#   x_ref    : (C, bc*HW)   activations, channels on sublanes, batch*pixels on lanes
#   p_ref    : (bc*HW, bc)  per-image mean-pool matrix (1/HW on own image's rows)
#   e_ref    : (bc, bc*HW)  per-image broadcast matrix (1.0 on own image's lanes)
#   wg_ref   : (C, C)       GlobalAttention 1x1 conv weight [c_out, c_in]
#   bg_ref   : (C, 1)
#   wcat_ref : (KN, C)      CategoryAttention 1x1 conv weight (KN = k*num_classes)
#   bcat_ref : (KN, 1)
#   ga_ref   : (KN, KN)     grouping matrix folding reshape(nc,k)+mean (symmetric)
#   wh_ref   : (NC, C)      head Linear weight
#   bh_ref   : (NC, 1)
#   o_ref    : (1, NC, bc)  logits for this chunk
# ----------------------------------------------------------------------------
def cabnet_kernel(x_ref, p_ref, e_ref, wg_ref, bg_ref, wcat_ref, bcat_ref,
                  ga_ref, wh_ref, bh_ref, o_ref, *, hw):
    x = x_ref[...]                                                 # (C, L)
    p_mat = p_ref[...]                                             # (L, bc)
    e_mat = e_ref[...]                                             # (bc, L)
    bc = e_mat.shape[0]

    # ---- GlobalAttentionBlock (pool -> 1x1 conv -> sigmoid gate) ---------
    xm = jnp.dot(x, p_mat, preferred_element_type=jnp.float32)     # (C, bc)
    g = _sigmoid(jnp.dot(wg_ref[...], xm,
                         preferred_element_type=jnp.float32)
                 + bg_ref[...])                                    # (C, bc)
    g_exp = jnp.dot(g, e_mat, preferred_element_type=jnp.float32)  # (C, L)
    out = x * g_exp                                                # (C, L)
    spatial = _sigmoid(jnp.mean(out, axis=0, keepdims=True))       # (1, L)
    y1 = out * spatial                                             # (C, L)

    # ---- CategoryAttentionBlock -------------------------------------------
    f = jnp.dot(wcat_ref[...], y1,
                preferred_element_type=jnp.float32) + bcat_ref[...]  # (KN, L)
    # Per-image channel max -> tiny (KN,KN)@(KN,1) grouping matvec ->
    # broadcast back onto that image's lane chunk.
    # (Replaces the old (KN,KN)@(KN,L) grouping matmul + (KN,L) intermediate.)
    vexp = None
    for b in range(bc):                                            # bc is tiny/static
        fm_b = jnp.max(f[:, b * hw:(b + 1) * hw], axis=1, keepdims=True)   # (KN,1)
        v_b = jnp.dot(ga_ref[...], fm_b, preferred_element_type=jnp.float32)
        contrib = v_b * e_mat[b:b + 1, :]                          # (KN, L)
        vexp = contrib if vexp is None else vexp + contrib
    att = jnp.sum(f * vexp, axis=0, keepdims=True)                 # (1, L) sublane reduce
    y2 = y1 * att                                                  # (C, L)

    # ---- global average pool + Linear head (pool BEFORE the matmul) --------
    ym = jnp.dot(y2, p_mat, preferred_element_type=jnp.float32)    # (C, bc)
    logits = jnp.dot(wh_ref[...], ym,
                     preferred_element_type=jnp.float32) + bh_ref[...]  # (NC, bc)
    o_ref[0] = logits


# ----------------------------------------------------------------------------
# Host-side helpers
# ----------------------------------------------------------------------------
def _group_matrix(k, num_classes):
    """A[i,j] = 1/(nc*k*k) if i//k == j//k else 0  (symmetric)."""
    kn = k * num_classes
    cls = jnp.arange(kn, dtype=jnp.int32) // k
    same = (cls[:, None] == cls[None, :]).astype(jnp.float32)
    return same * (1.0 / float(num_classes * k * k))


def _chunk_matrices(bc, hw):
    """Mean-pool (L,bc) and lane-broadcast (bc,L) matrices for a bc-image chunk."""
    owner = jnp.arange(bc * hw, dtype=jnp.int32) // hw             # (L,)
    ind = (owner[:, None] == jnp.arange(bc, dtype=jnp.int32)[None, :])
    ind = ind.astype(jnp.float32)                                  # (L, bc)
    return ind * (1.0 / float(hw)), ind.T                          # P, E


def _default_num_chunks(batch):
    # v7x has 2 TensorCores/chip -> one "parallel" chunk per TC.  v5e/v6e have
    # a single TC where every extra grid step is pure overhead, so fuse fully.
    try:
        kind = jax.devices()[0].device_kind.lower()
    except Exception:
        kind = ""
    tc = 2 if "v7" in kind else 1
    while tc > 1 and batch % tc:
        tc -= 1
    return max(1, min(tc, batch))


@functools.partial(jax.jit, static_argnames=("num_chunks",))
def _cabnet_forward(x_nchw, params, *, num_chunks):
    B, C, H, W = x_nchw.shape
    hw = H * W
    kn = params['wcat'].shape[0]
    nc = params['wh'].shape[0]
    k = kn // nc
    assert B % num_chunks == 0
    bc = B // num_chunks
    L = bc * hw

    # NCHW -> (C, B*HW): channels on sublanes, batch*pixels on lanes (HW = 256
    # is a multiple of 128, so each image's lane chunk stays tile aligned).
    # Pure layout plumbing, done once by XLA outside the kernel.
    x_slab = jnp.transpose(x_nchw.astype(jnp.float32).reshape(B, C, hw),
                           (1, 0, 2)).reshape(C, B * hw)

    ga = _group_matrix(k, nc)
    p_mat, e_mat = _chunk_matrices(bc, hw)

    out = pl.pallas_call(
        functools.partial(cabnet_kernel, hw=hw),
        out_shape=jax.ShapeDtypeStruct((num_chunks, nc, bc), jnp.float32),
        grid=(num_chunks,),
        in_specs=[
            pl.BlockSpec((C, L), lambda i: (0, i)),        # activation chunk
            pl.BlockSpec((L, bc), lambda i: (0, 0)),       # mean-pool matrix
            pl.BlockSpec((bc, L), lambda i: (0, 0)),       # broadcast matrix
            pl.BlockSpec((C, C), lambda i: (0, 0)),        # wg
            pl.BlockSpec((C, 1), lambda i: (0, 0)),        # bg
            pl.BlockSpec((kn, C), lambda i: (0, 0)),       # wcat
            pl.BlockSpec((kn, 1), lambda i: (0, 0)),       # bcat
            pl.BlockSpec((kn, kn), lambda i: (0, 0)),      # grouping matrix
            pl.BlockSpec((nc, C), lambda i: (0, 0)),       # wh
            pl.BlockSpec((nc, 1), lambda i: (0, 0)),       # bh
        ],
        out_specs=pl.BlockSpec((1, nc, bc), lambda i: (i, 0, 0)),
        compiler_params=pltpu.CompilerParams(
            dimension_semantics=("parallel",)),            # chunks independent
    )(x_slab, p_mat, e_mat, params['wg'], params['bg'],
      params['wcat'], params['bcat'], ga, params['wh'], params['bh'])

    # (num_chunks, NC, bc) -> (B, NC)
    return jnp.transpose(out, (0, 2, 1)).reshape(B, nc)


def cabnet_forward(x_nchw, params, num_chunks=None):
    if num_chunks is None:
        num_chunks = _default_num_chunks(x_nchw.shape[0])
    return _cabnet_forward(x_nchw, params, num_chunks=num_chunks)


# ----------------------------------------------------------------------------
# Parameter init (deterministic, synthetic) and a pure-JAX reference that
# mirrors the PyTorch graph op-for-op (for a sanity check).
# ----------------------------------------------------------------------------
def init_params(key, dim, k, num_classes):
    kn = k * num_classes
    keys = jax.random.split(key, 6)

    def nrm(kk, shape, scale):
        return jax.random.normal(kk, shape, jnp.float32) * scale

    return {
        'wg': nrm(keys[0], (dim, dim), 0.2),           # Conv2d(dim, dim, 1) weight
        'bg': nrm(keys[1], (dim, 1), 0.1),
        'wcat': nrm(keys[2], (kn, dim), 0.2),          # Conv2d(dim, k*nc, 1) weight
        'bcat': nrm(keys[3], (kn, 1), 0.1),
        'wh': nrm(keys[4], (num_classes, dim), 0.2),   # Linear(dim, nc) weight
        'bh': nrm(keys[5], (num_classes, 1), 0.1),
    }


def cabnet_reference(x_nchw, params):
    B, C, H, W = x_nchw.shape
    kn = params['wcat'].shape[0]
    nc = params['wh'].shape[0]
    k = kn // nc
    x = x_nchw.astype(jnp.float32)

    # GlobalAttentionBlock
    pooled = jnp.mean(x, axis=(2, 3))                               # (B, C)
    g = _sigmoid(pooled @ params['wg'].T + params['bg'][:, 0])      # (B, C)
    out = x * g[:, :, None, None]
    spatial = _sigmoid(jnp.mean(out, axis=1, keepdims=True))        # (B,1,H,W)
    y1 = spatial * out

    # CategoryAttentionBlock
    f = (jnp.einsum('oc,bchw->bohw', params['wcat'], y1)
         + params['bcat'][:, 0][None, :, None, None])               # (B,KN,H,W)
    fmax = jnp.max(f, axis=(2, 3))                                  # (B, KN)
    catmax = jnp.mean(fmax.reshape(B, nc, k), axis=-1)              # (B, nc)
    fmean = jnp.mean(f.reshape(B, nc, k, H, W), axis=2)             # (B,nc,H,W)
    att = jnp.mean(fmean * catmax[:, :, None, None], axis=1, keepdims=True)
    y2 = y1 * att

    # pool + head
    pooled2 = jnp.mean(y2, axis=(2, 3))                             # (B, C)
    return pooled2 @ params['wh'].T + params['bh'][:, 0]


if __name__ == "__main__":
    B, DIM, H, W = 2, 32, 16, 16
    K_FACTOR, NUM_CLASSES = 4, 5

    key = jax.random.PRNGKey(0)
    kx, kp = jax.random.split(key)
    x = jax.random.normal(kx, (B, DIM, H, W), jnp.float32)   # NCHW, like torch
    params = init_params(kp, DIM, K_FACTOR, NUM_CLASSES)

    out = cabnet_forward(x, params)
    out = jax.block_until_ready(out)
    assert out.shape == (B, NUM_CLASSES) and out.dtype == jnp.float32

    ref = cabnet_reference(x, params)
    assert jnp.allclose(out, ref, rtol=5e-4, atol=5e-4), (out, ref)
    print("KERNEL_OK")
</pallas_src>

<mosaic_0001>
module attributes {stable_mosaic.version = 11 : i64} {
  func.func @cabnet_kernel(%arg0: i32, %arg1: memref<32x512xf32, #tpu.memory_space<vmem>>, %arg2: memref<512x2xf32, #tpu.memory_space<vmem>>, %arg3: memref<2x512xf32, #tpu.memory_space<vmem>>, %arg4: memref<32x32xf32, #tpu.memory_space<vmem>>, %arg5: memref<32x1xf32, #tpu.memory_space<vmem>>, %arg6: memref<20x32xf32, #tpu.memory_space<vmem>>, %arg7: memref<20x1xf32, #tpu.memory_space<vmem>>, %arg8: memref<20x20xf32, #tpu.memory_space<vmem>>, %arg9: memref<5x32xf32, #tpu.memory_space<vmem>>, %arg10: memref<5x1xf32, #tpu.memory_space<vmem>>, %arg11: memref<1x5x2xf32, #tpu.memory_space<vmem>>) attributes {dimension_semantics = [#tpu.dimension_semantics<parallel>], iteration_bounds = array<i64: 1>, scalar_prefetch = 0 : i64, scratch_operands = 0 : i64, tpu.core_type = #tpu.core_type<tc>, window_params = [{transform_indices = @transform_0, window_bounds = array<i64: 32, 512>}, {pipeline_mode = #tpu.pipeline_mode<synchronous>, transform_indices = @transform_1, window_bounds = array<i64: 512, 2>}, {pipeline_mode = #tpu.pipeline_mode<synchronous>, transform_indices = @transform_2, window_bounds = array<i64: 2, 512>}, {pipeline_mode = #tpu.pipeline_mode<synchronous>, transform_indices = @transform_3, window_bounds = array<i64: 32, 32>}, {pipeline_mode = #tpu.pipeline_mode<synchronous>, transform_indices = @transform_4, window_bounds = array<i64: 32, 1>}, {pipeline_mode = #tpu.pipeline_mode<synchronous>, transform_indices = @transform_5, window_bounds = array<i64: 20, 32>}, {pipeline_mode = #tpu.pipeline_mode<synchronous>, transform_indices = @transform_6, window_bounds = array<i64: 20, 1>}, {pipeline_mode = #tpu.pipeline_mode<synchronous>, transform_indices = @transform_7, window_bounds = array<i64: 20, 20>}, {pipeline_mode = #tpu.pipeline_mode<synchronous>, transform_indices = @transform_8, window_bounds = array<i64: 5, 32>}, {pipeline_mode = #tpu.pipeline_mode<synchronous>, transform_indices = @transform_9, window_bounds = array<i64: 5, 1>}, {transform_indices = @transform_10, window_bounds = array<i64: 1, 5, 2>}]} {
    %c0 = arith.constant 0 : index
    %c0_0 = arith.constant 0 : index
    %0 = vector.load %arg1[%c0, %c0_0] : memref<32x512xf32, #tpu.memory_space<vmem>>, vector<32x512xf32>
    %c0_1 = arith.constant 0 : index
    %c0_2 = arith.constant 0 : index
    %1 = vector.load %arg2[%c0_1, %c0_2] : memref<512x2xf32, #tpu.memory_space<vmem>>, vector<512x2xf32>
    %c0_3 = arith.constant 0 : index
    %c0_4 = arith.constant 0 : index
    %2 = vector.load %arg3[%c0_3, %c0_4] : memref<2x512xf32, #tpu.memory_space<vmem>>, vector<2x512xf32>
    %cst = arith.constant dense<0.000000e+00> : vector<32x2xf32>
    %3 = tpu.matmul %0, %1, %cst {dimension_numbers = #tpu.dot_dimension_numbers<[1], [0], [0], [1], [0, 0, 1, 1], [], []>} : vector<32x512xf32>, vector<512x2xf32>, vector<32x2xf32> -> vector<32x2xf32>
    %c0_5 = arith.constant 0 : index
    %c0_6 = arith.constant 0 : index
    %4 = vector.load %arg4[%c0_5, %c0_6] : memref<32x32xf32, #tpu.memory_space<vmem>>, vector<32x32xf32>
    %cst_7 = arith.constant dense<0.000000e+00> : vector<32x2xf32>
    %5 = tpu.matmul %4, %3, %cst_7 {dimension_numbers = #tpu.dot_dimension_numbers<[1], [0], [0], [1], [0, 0, 1, 1], [], []>} : vector<32x32xf32>, vector<32x2xf32>, vector<32x2xf32> -> vector<32x2xf32>
    %c0_8 = arith.constant 0 : index
    %c0_9 = arith.constant 0 : index
    %6 = vector.load %arg5[%c0_8, %c0_9] : memref<32x1xf32, #tpu.memory_space<vmem>>, vector<32x1xf32>
    %7 = vector.broadcast %6 : vector<32x1xf32> to vector<32x2xf32>
    %8 = arith.addf %5, %7 : vector<32x2xf32>
    %cst_10 = arith.constant 0.000000e+00 : f32
    %9 = vector.broadcast %cst_10 : f32 to vector<32x2xf32>
    %10 = arith.subf %9, %8 : vector<32x2xf32>
    %11 = math.exp %10 : vector<32x2xf32>
    %cst_11 = arith.constant 1.000000e+00 : f32
    %12 = vector.broadcast %cst_11 : f32 to vector<32x2xf32>
    %13 = arith.addf %12, %11 : vector<32x2xf32>
    %cst_12 = arith.constant 1.000000e+00 : f32
    %14 = vector.broadcast %cst_12 : f32 to vector<32x2xf32>
    %15 = arith.divf %14, %13 : vector<32x2xf32>
    %cst_13 = arith.constant dense<0.000000e+00> : vector<32x512xf32>
    %16 = tpu.matmul %15, %2, %cst_13 {dimension_numbers = #tpu.dot_dimension_numbers<[1], [0], [0], [1], [0, 0, 1, 1], [], []>} : vector<32x2xf32>, vector<2x512xf32>, vector<32x512xf32> -> vector<32x512xf32>
    %17 = arith.mulf %0, %16 : vector<32x512xf32>
    %cst_14 = arith.constant dense<0.000000e+00> : vector<512xf32>
    %18 = vector.multi_reduction <add>, %17, %cst_14 [0] : vector<32x512xf32> to vector<512xf32>
    %19 = vector.shape_cast %18 : vector<512xf32> to vector<1x512xf32>
    %cst_15 = arith.constant 3.200000e+01 : f32
    %20 = vector.broadcast %cst_15 : f32 to vector<1x512xf32>
    %21 = arith.divf %19, %20 : vector<1x512xf32>
    %cst_16 = arith.constant 0.000000e+00 : f32
    %22 = vector.broadcast %cst_16 : f32 to vector<1x512xf32>
    %23 = arith.subf %22, %21 : vector<1x512xf32>
    %24 = math.exp %23 : vector<1x512xf32>
    %cst_17 = arith.constant 1.000000e+00 : f32
    %25 = vector.broadcast %cst_17 : f32 to vector<1x512xf32>
    %26 = arith.addf %25, %24 : vector<1x512xf32>
    %cst_18 = arith.constant 1.000000e+00 : f32
    %27 = vector.broadcast %cst_18 : f32 to vector<1x512xf32>
    %28 = arith.divf %27, %26 : vector<1x512xf32>
    %29 = vector.broadcast %28 : vector<1x512xf32> to vector<32x512xf32>
    %30 = arith.mulf %17, %29 : vector<32x512xf32>
    %c0_19 = arith.constant 0 : index
    %c0_20 = arith.constant 0 : index
    %31 = vector.load %arg6[%c0_19, %c0_20] : memref<20x32xf32, #tpu.memory_space<vmem>>, vector<20x32xf32>
    %cst_21 = arith.constant dense<0.000000e+00> : vector<20x512xf32>
    %32 = tpu.matmul %31, %30, %cst_21 {dimension_numbers = #tpu.dot_dimension_numbers<[1], [0], [0], [1], [0, 0, 1, 1], [], []>} : vector<20x32xf32>, vector<32x512xf32>, vector<20x512xf32> -> vector<20x512xf32>
    %c0_22 = arith.constant 0 : index
    %c0_23 = arith.constant 0 : index
    %33 = vector.load %arg7[%c0_22, %c0_23] : memref<20x1xf32, #tpu.memory_space<vmem>>, vector<20x1xf32>
    %34 = vector.broadcast %33 : vector<20x1xf32> to vector<20x512xf32>
    %35 = arith.addf %32, %34 : vector<20x512xf32>
    %36 = vector.extract_strided_slice %35 {offsets = [0, 0], sizes = [20, 256], strides = [1, 1]} : vector<20x512xf32> to vector<20x256xf32>
    %cst_24 = arith.constant dense<0xFF800000> : vector<20xf32>
    %37 = vector.multi_reduction <maximumf>, %36, %cst_24 [1] : vector<20x256xf32> to vector<20xf32>
    %38 = vector.shape_cast %37 : vector<20xf32> to vector<20x1xf32>
    %c0_25 = arith.constant 0 : index
    %c0_26 = arith.constant 0 : index
    %39 = vector.load %arg8[%c0_25, %c0_26] : memref<20x20xf32, #tpu.memory_space<vmem>>, vector<20x20xf32>
    %cst_27 = arith.constant dense<0.000000e+00> : vector<20x1xf32>
    %40 = tpu.matmul %39, %38, %cst_27 {dimension_numbers = #tpu.dot_dimension_numbers<[1], [0], [0], [1], [0, 0, 1, 1], [], []>} : vector<20x20xf32>, vector<20x1xf32>, vector<20x1xf32> -> vector<20x1xf32>
    %41 = vector.extract_strided_slice %2 {offsets = [0, 0], sizes = [1, 512], strides = [1, 1]} : vector<2x512xf32> to vector<1x512xf32>
    %42 = vector.broadcast %40 : vector<20x1xf32> to vector<20x512xf32>
    %43 = vector.broadcast %41 : vector<1x512xf32> to vector<20x512xf32>
    %44 = arith.mulf %42, %43 : vector<20x512xf32>
    %45 = vector.extract_strided_slice %35 {offsets = [0, 256], sizes = [20, 256], strides = [1, 1]} : vector<20x512xf32> to vector<20x256xf32>
    %cst_28 = arith.constant dense<0xFF800000> : vector<20xf32>
    %46 = vector.multi_reduction <maximumf>, %45, %cst_28 [1] : vector<20x256xf32> to vector<20xf32>
    %47 = vector.shape_cast %46 : vector<20xf32> to vector<20x1xf32>
    %c0_29 = arith.constant 0 : index
    %c0_30 = arith.constant 0 : index
    %48 = vector.load %arg8[%c0_29, %c0_30] : memref<20x20xf32, #tpu.memory_space<vmem>>, vector<20x20xf32>
    %cst_31 = arith.constant dense<0.000000e+00> : vector<20x1xf32>
    %49 = tpu.matmul %48, %47, %cst_31 {dimension_numbers = #tpu.dot_dimension_numbers<[1], [0], [0], [1], [0, 0, 1, 1], [], []>} : vector<20x20xf32>, vector<20x1xf32>, vector<20x1xf32> -> vector<20x1xf32>
    %50 = vector.extract_strided_slice %2 {offsets = [1, 0], sizes = [1, 512], strides = [1, 1]} : vector<2x512xf32> to vector<1x512xf32>
    %51 = vector.broadcast %49 : vector<20x1xf32> to vector<20x512xf32>
    %52 = vector.broadcast %50 : vector<1x512xf32> to vector<20x512xf32>
    %53 = arith.mulf %51, %52 : vector<20x512xf32>
    %54 = arith.addf %44, %53 : vector<20x512xf32>
    %55 = arith.mulf %35, %54 : vector<20x512xf32>
    %cst_32 = arith.constant dense<0.000000e+00> : vector<512xf32>
    %56 = vector.multi_reduction <add>, %55, %cst_32 [0] : vector<20x512xf32> to vector<512xf32>
    %57 = vector.shape_cast %56 : vector<512xf32> to vector<1x512xf32>
    %58 = vector.broadcast %57 : vector<1x512xf32> to vector<32x512xf32>
    %59 = arith.mulf %30, %58 : vector<32x512xf32>
    %cst_33 = arith.constant dense<0.000000e+00> : vector<32x2xf32>
    %60 = tpu.matmul %59, %1, %cst_33 {dimension_numbers = #tpu.dot_dimension_numbers<[1], [0], [0], [1], [0, 0, 1, 1], [], []>} : vector<32x512xf32>, vector<512x2xf32>, vector<32x2xf32> -> vector<32x2xf32>
    %c0_34 = arith.constant 0 : index
    %c0_35 = arith.constant 0 : index
    %61 = vector.load %arg9[%c0_34, %c0_35] : memref<5x32xf32, #tpu.memory_space<vmem>>, vector<5x32xf32>
    %cst_36 = arith.constant dense<0.000000e+00> : vector<5x2xf32>
    %62 = tpu.matmul %61, %60, %cst_36 {dimension_numbers = #tpu.dot_dimension_numbers<[1], [0], [0], [1], [0, 0, 1, 1], [], []>} : vector<5x32xf32>, vector<32x2xf32>, vector<5x2xf32> -> vector<5x2xf32>
    %c0_37 = arith.constant 0 : index
    %c0_38 = arith.constant 0 : index
    %63 = vector.load %arg10[%c0_37, %c0_38] : memref<5x1xf32, #tpu.memory_space<vmem>>, vector<5x1xf32>
    %64 = vector.broadcast %63 : vector<5x1xf32> to vector<5x2xf32>
    %65 = arith.addf %62, %64 : vector<5x2xf32>
    %c0_39 = arith.constant 0 : index
    %c0_40 = arith.constant 0 : index
    %c0_41 = arith.constant 0 : index
    %66 = vector.load %arg11[%c0_39, %c0_40, %c0_41] : memref<1x5x2xf32, #tpu.memory_space<vmem>>, vector<1x5x2xf32>
    %67 = vector.shape_cast %66 : vector<1x5x2xf32> to vector<5x2xf32>
    %68 = vector.shape_cast %65 : vector<5x2xf32> to vector<1x5x2xf32>
    tpu.vector_store %arg11[%c0_39, %c0_40, %c0_41], %68 {strides = array<i32>} : memref<1x5x2xf32, #tpu.memory_space<vmem>>, vector<1x5x2xf32>,
    return
  }
  func.func @transform_0(%arg0: i32) -> (i32, i32) {
    %c0_i32 = arith.constant 0 : i32
    %c0_i32_0 = arith.constant 0 : i32
    return %c0_i32, %arg0 : i32, i32
  }
  func.func @transform_1(%arg0: i32) -> (i32, i32) {
    %c0_i32 = arith.constant 0 : i32
    %c0_i32_0 = arith.constant 0 : i32
    %c0_i32_1 = arith.constant 0 : i32
    return %c0_i32, %c0_i32_0 : i32, i32
  }
  func.func @transform_2(%arg0: i32) -> (i32, i32) {
    %c0_i32 = arith.constant 0 : i32
    %c0_i32_0 = arith.constant 0 : i32
    %c0_i32_1 = arith.constant 0 : i32
    return %c0_i32, %c0_i32_0 : i32, i32
  }
  func.func @transform_3(%arg0: i32) -> (i32, i32) {
    %c0_i32 = arith.constant 0 : i32
    %c0_i32_0 = arith.constant 0 : i32
    %c0_i32_1 = arith.constant 0 : i32
    return %c0_i32, %c0_i32_0 : i32, i32
  }
  func.func @transform_4(%arg0: i32) -> (i32, i32) {
    %c0_i32 = arith.constant 0 : i32
    %c0_i32_0 = arith.constant 0 : i32
    %c0_i32_1 = arith.constant 0 : i32
    return %c0_i32, %c0_i32_0 : i32, i32
  }
  func.func @transform_5(%arg0: i32) -> (i32, i32) {
    %c0_i32 = arith.constant 0 : i32
    %c0_i32_0 = arith.constant 0 : i32
    %c0_i32_1 = arith.constant 0 : i32
    return %c0_i32, %c0_i32_0 : i32, i32
  }
  func.func @transform_6(%arg0: i32) -> (i32, i32) {
    %c0_i32 = arith.constant 0 : i32
    %c0_i32_0 = arith.constant 0 : i32
    %c0_i32_1 = arith.constant 0 : i32
    return %c0_i32, %c0_i32_0 : i32, i32
  }
  func.func @transform_7(%arg0: i32) -> (i32, i32) {
    %c0_i32 = arith.constant 0 : i32
    %c0_i32_0 = arith.constant 0 : i32
    %c0_i32_1 = arith.constant 0 : i32
    return %c0_i32, %c0_i32_0 : i32, i32
  }
  func.func @transform_8(%arg0: i32) -> (i32, i32) {
    %c0_i32 = arith.constant 0 : i32
    %c0_i32_0 = arith.constant 0 : i32
    %c0_i32_1 = arith.constant 0 : i32
    return %c0_i32, %c0_i32_0 : i32, i32
  }
  func.func @transform_9(%arg0: i32) -> (i32, i32) {
    %c0_i32 = arith.constant 0 : i32
    %c0_i32_0 = arith.constant 0 : i32
    %c0_i32_1 = arith.constant 0 : i32
    return %c0_i32, %c0_i32_0 : i32, i32
  }
  func.func @transform_10(%arg0: i32) -> (i32, i32, i32) {
    %c0_i32 = arith.constant 0 : i32
    %c0_i32_0 = arith.constant 0 : i32
    %c0_i32_1 = arith.constant 0 : i32
    return %arg0, %c0_i32, %c0_i32_0 : i32, i32, i32
  }
}

</mosaic_0001>

<llo_original>
// kernel: _cabnet_forward.1
$region0: #{_cabnet_forward.1}
  #allocation0 [shape = 'u32[]', space=smem, size = 0x4, offset = 0x4, fixed_abs, tag = 'smem constant byte address 0x4 - core index']
  #allocation1 [shape = 'u32[144,128]{1,0:T(1,128)}', space=vmem, size = 0x12000, scoped, tag = 'internal scratch']
  %s0 = inlined_call_operand.vmem [shape: f32[32,512], index: 0, kind: input, shape index: {}]
  %s1 = inlined_call_operand.vmem [shape: f32[512,2], index: 1, kind: input, shape index: {}]
  %s2 = inlined_call_operand.vmem [shape: f32[2,512], index: 2, kind: input, shape index: {}]
  %s3 = inlined_call_operand.vmem [shape: f32[32,32], index: 3, kind: input, shape index: {}]
  %s4 = inlined_call_operand.vmem [shape: f32[32,1], index: 4, kind: input, shape index: {}]
  %s5 = inlined_call_operand.vmem [shape: f32[20,32], index: 5, kind: input, shape index: {}]
  %s6 = inlined_call_operand.vmem [shape: f32[20,1], index: 6, kind: input, shape index: {}]
  %s7 = inlined_call_operand.vmem [shape: f32[20,20], index: 7, kind: input, shape index: {}]
  %s8 = inlined_call_operand.vmem [shape: f32[5,32], index: 8, kind: input, shape index: {}]
  %s9 = inlined_call_operand.vmem [shape: f32[5,1], index: 9, kind: input, shape index: {}]
  %s10 = inlined_call_operand.vmem [shape: f32[1,5,2], index: 10, kind: output, shape index: {}]
  %s11 = sld [smem:[#allocation0]]
  $region50: #{_cabnet_forward.1} parent=0
    _
  %s13 = ssub.s32 1, %s11
  %s14 = scalar_select 0, %s13, %s11
  // Predicated region
  $region2: #{_cabnet_forward.1} parent=0 // pred_check
    _
  $region3: #{_cabnet_forward.1} parent=0 // pred_check_branch
    %16 = sbr.rel (0) target = $region5
  $region4: #{_cabnet_forward.1} parent=0 // pred_region
    _
  $region5: #{_cabnet_forward.1} parent=0 // pred_fallthru
    _
  // Predicated region
  $region6: #{_cabnet_forward.1} parent=0 // pred_check
    _
  $region7: #{_cabnet_forward.1} parent=0 // pred_check_branch
    %18 = sbr.rel (0) target = $region9
  $region8: #{_cabnet_forward.1} parent=0 // pred_region
    _
  $region9: #{_cabnet_forward.1} parent=0 // pred_fallthru
    _
  // Predicated region
  $region10: #{_cabnet_forward.1} parent=0 // pred_check
    _
  $region11: #{_cabnet_forward.1} parent=0 // pred_check_branch
    %20 = sbr.rel (0) target = $region13
  $region12: #{_cabnet_forward.1} parent=0 // pred_region
    _
  $region13: #{_cabnet_forward.1} parent=0 // pred_fallthru
    _
  // Predicated region
  $region14: #{_cabnet_forward.1} parent=0 // pred_check
    _
  $region15: #{_cabnet_forward.1} parent=0 // pred_check_branch
    %22 = sbr.rel (0) target = $region17
  $region16: #{_cabnet_forward.1} parent=0 // pred_region
    _
  $region17: #{_cabnet_forward.1} parent=0 // pred_fallthru
    _
  // Predicated region
  $region18: #{_cabnet_forward.1} parent=0 // pred_check
    _
  $region19: #{_cabnet_forward.1} parent=0 // pred_check_branch
    %24 = sbr.rel (0) target = $region21
  $region20: #{_cabnet_forward.1} parent=0 // pred_region
    _
  $region21: #{_cabnet_forward.1} parent=0 // pred_fallthru
    _
  // Predicated region
  $region22: #{_cabnet_forward.1} parent=0 // pred_check
    _
  $region23: #{_cabnet_forward.1} parent=0 // pred_check_branch
    %26 = sbr.rel (0) target = $region25
  $region24: #{_cabnet_forward.1} parent=0 // pred_region
    _
  $region25: #{_cabnet_forward.1} parent=0 // pred_fallthru
    _
  // Predicated region
  $region26: #{_cabnet_forward.1} parent=0 // pred_check
    _
  $region27: #{_cabnet_forward.1} parent=0 // pred_check_branch
    %28 = sbr.rel (0) target = $region29
  $region28: #{_cabnet_forward.1} parent=0 // pred_region
    _
  $region29: #{_cabnet_forward.1} parent=0 // pred_fallthru
    _
  // Predicated region
  $region30: #{_cabnet_forward.1} parent=0 // pred_check
    _
  $region31: #{_cabnet_forward.1} parent=0 // pred_check_branch
    %30 = sbr.rel (0) target = $region33
  $region32: #{_cabnet_forward.1} parent=0 // pred_region
    _
  $region33: #{_cabnet_forward.1} parent=0 // pred_fallthru
    _
  // Predicated region
  $region34: #{_cabnet_forward.1} parent=0 // pred_check
    _
  $region35: #{_cabnet_forward.1} parent=0 // pred_check_branch
    %32 = sbr.rel (0) target = $region37
  $region36: #{_cabnet_forward.1} parent=0 // pred_region
    _
  $region37: #{_cabnet_forward.1} parent=0 // pred_fallthru
    _
  // Predicated region
  $region38: #{_cabnet_forward.1} parent=0 // pred_check
    _
  $region39: #{_cabnet_forward.1} parent=0 // pred_check_branch
    %34 = sbr.rel (0) target = $region41
  $region40: #{_cabnet_forward.1} parent=0 // pred_region
    _
  $region41: #{_cabnet_forward.1} parent=0 // pred_fallthru
    _
  %v35 = vld [vmem:[%s0] sm:$0xff]
  %v36 = vld [vmem:[%s0 + $0x8] sm:$0xff]
  %v37 = vld [vmem:[%s0 + $0x10] sm:$0xff]
  %v38 = vld [vmem:[%s0 + $0x18] sm:$0xff]
  %v39 = vld [vmem:[%s0 + $0x20] sm:$0xff]
  %v40 = vld [vmem:[%s0 + $0x28] sm:$0xff]
  %v41 = vld [vmem:[%s0 + $0x30] sm:$0xff]
  %v42 = vld [vmem:[%s0 + $0x38] sm:$0xff]
  %v43 = vld [vmem:[%s0 + $0x40] sm:$0xff]
  %v44 = vld [vmem:[%s0 + $0x48] sm:$0xff]
  %v45 = vld [vmem:[%s0 + $0x50] sm:$0xff]
  %v46 = vld [vmem:[%s0 + $0x58] sm:$0xff]
  %v47 = vld [vmem:[%s0 + $0x60] sm:$0xff]
  %v48 = vld [vmem:[%s0 + $0x68] sm:$0xff]
  %v49 = vld [vmem:[%s0 + $0x70] sm:$0xff]
  %v50 = vld [vmem:[%s0 + $0x78] sm:$0xff]
  %v51 = vld [vmem:[%s1] sm:$0xff]
  %v52 = vld [vmem:[%s1 + $0x8] sm:$0xff]
  %v53 = vld [vmem:[%s1 + $0x10] sm:$0xff]
  %v54 = vld [vmem:[%s1 + $0x18] sm:$0xff]
  %v55 = vld [vmem:[%s1 + $0x20] sm:$0xff]
  %v56 = vld [vmem:[%s1 + $0x28] sm:$0xff]
  %v57 = vld [vmem:[%s1 + $0x30] sm:$0xff]
  %v58 = vld [vmem:[%s1 + $0x38] sm:$0xff]
  %v59 = vld [vmem:[%s1 + $0x40] sm:$0xff]
  %v60 = vld [vmem:[%s1 + $0x48] sm:$0xff]
  %v61 = vld [vmem:[%s1 + $0x50] sm:$0xff]
  %v62 = vld [vmem:[%s1 + $0x58] sm:$0xff]
  %v63 = vld [vmem:[%s1 + $0x60] sm:$0xff]
  %v64 = vld [vmem:[%s1 + $0x68] sm:$0xff]
  %v65 = vld [vmem:[%s1 + $0x70] sm:$0xff]
  %v66 = vld [vmem:[%s1 + $0x78] sm:$0xff]
  %v67 = vld [vmem:[%s1 + $0x80] sm:$0xff]
  %v68 = vld [vmem:[%s1 + $0x88] sm:$0xff]
  %v69 = vld [vmem:[%s1 + $0x90] sm:$0xff]
  %v70 = vld [vmem:[%s1 + $0x98] sm:$0xff]
  %v71 = vld [vmem:[%s1 + $0xa0] sm:$0xff]
  %v72 = vld [vmem:[%s1 + $0xa8] sm:$0xff]
  %v73 = vld [vmem:[%s1 + $0xb0] sm:$0xff]
  %v74 = vld [vmem:[%s1 + $0xb8] sm:$0xff]
  %v75 = vld [vmem:[%s1 + $0xc0] sm:$0xff]
  %v76 = vld [vmem:[%s1 + $0xc8] sm:$0xff]
  %v77 = vld [vmem:[%s1 + $0xd0] sm:$0xff]
  %v78 = vld [vmem:[%s1 + $0xd8] sm:$0xff]
  %v79 = vld [vmem:[%s1 + $0xe0] sm:$0xff]
  %v80 = vld [vmem:[%s1 + $0xe8] sm:$0xff]
  %v81 = vld [vmem:[%s1 + $0xf0] sm:$0xff]
  %v82 = vld [vmem:[%s1 + $0xf8] sm:$0xff]
  %v83 = vld [vmem:[%s1 + $0x100] sm:$0xff]
  %v84 = vld [vmem:[%s1 + $0x108] sm:$0xff]
  %v85 = vld [vmem:[%s1 + $0x110] sm:$0xff]
  %v86 = vld [vmem:[%s1 + $0x118] sm:$0xff]
  %v87 = vld [vmem:[%s1 + $0x120] sm:$0xff]
  %v88 = vld [vmem:[%s1 + $0x128] sm:$0xff]
  %v89 = vld [vmem:[%s1 + $0x130] sm:$0xff]
  %v90 = vld [vmem:[%s1 + $0x138] sm:$0xff]
  %v91 = vld [vmem:[%s1 + $0x140] sm:$0xff]
  %v92 = vld [vmem:[%s1 + $0x148] sm:$0xff]
  %v93 = vld [vmem:[%s1 + $0x150] sm:$0xff]
  %v94 = vld [vmem:[%s1 + $0x158] sm:$0xff]
  %v95 = vld [vmem:[%s1 + $0x160] sm:$0xff]
  %v96 = vld [vmem:[%s1 + $0x168] sm:$0xff]
  %v97 = vld [vmem:[%s1 + $0x170] sm:$0xff]
  %v98 = vld [vmem:[%s1 + $0x178] sm:$0xff]
  %v99 = vld [vmem:[%s1 + $0x180] sm:$0xff]
  %v100 = vld [vmem:[%s1 + $0x188] sm:$0xff]
  %v101 = vld [vmem:[%s1 + $0x190] sm:$0xff]
  %v102 = vld [vmem:[%s1 + $0x198] sm:$0xff]
  %v103 = vld [vmem:[%s1 + $0x1a0] sm:$0xff]
  %v104 = vld [vmem:[%s1 + $0x1a8] sm:$0xff]
  %v105 = vld [vmem:[%s1 + $0x1b0] sm:$0xff]
  %v106 = vld [vmem:[%s1 + $0x1b8] sm:$0xff]
  %v107 = vld [vmem:[%s1 + $0x1c0] sm:$0xff]
  %v108 = vld [vmem:[%s1 + $0x1c8] sm:$0xff]
  %v109 = vld [vmem:[%s1 + $0x1d0] sm:$0xff]
  %v110 = vld [vmem:[%s1 + $0x1d8] sm:$0xff]
  %v111 = vld [vmem:[%s1 + $0x1e0] sm:$0xff]
  %v112 = vld [vmem:[%s1 + $0x1e8] sm:$0xff]
  %v113 = vld [vmem:[%s1 + $0x1f0] sm:$0xff]
  %v114 = vld [vmem:[%s1 + $0x1f8] sm:$0xff]
  %v115 = vld [vmem:[%s2] sm:$0xff]
  %116 = vmatprep.subr.mxu0 0.0
  %117 = vmatpush1.msra.mxu0 %v66
  %118 = vmatprep.subr.mxu0 0.0
  %119 = vmatpush1.msra.mxu0 %v65
  %120 = vmatprep.subr.mxu0 0.0
  %121 = vmatpush1.msra.mxu0 %v64
  %122 = vmatprep.subr.mxu0 0.0
  %123 = vmatpush1.msra.mxu0 %v63
  %124 = vmatprep.subr.mxu0 0.0
  %125 = vmatpush1.msra.mxu0 %v62
  %126 = vmatprep.subr.mxu0 0.0
  %127 = vmatpush1.msra.mxu0 %v61
  %128 = vmatprep.subr.mxu0 0.0
  %129 = vmatpush1.msra.mxu0 %v60
  %130 = vmatprep.subr.mxu0 0.0
  %131 = vmatpush1.msra.mxu0 %v59
  %132 = vmatprep.subr.mxu0 0.0
  %133 = vmatpush1.msra.mxu0 %v58
  %134 = vmatprep.subr.mxu0 0.0
  %135 = vmatpush1.msra.mxu0 %v57
  %136 = vmatprep.subr.mxu0 0.0
  %137 = vmatpush1.msra.mxu0 %v56
  %138 = vmatprep.subr.mxu0 0.0
  %139 = vmatpush1.msra.mxu0 %v55
  %140 = vmatprep.subr.mxu0 0.0
  %141 = vmatpush1.msra.mxu0 %v54
  %142 = vmatprep.subr.mxu0 0.0
  %143 = vmatpush1.msra.mxu0 %v53
  %144 = vmatprep.subr.mxu0 0.0
  %145 = vmatpush1.msra.mxu0 %v52
  %146 = vmatprep.subr.mxu0 0.0
  %147 = vmatpush1.msra.mxu0 %v51
  %148 = vmatprep.subr.mxu0 0.0
  %149 = vmatpush2.msra.mxu0 %v82
  %150 = vmatprep.subr.mxu0 0.0
  %151 = vmatpush2.msra.mxu0 %v81
  %152 = vmatprep.subr.mxu0 0.0
  %153 = vmatpush2.msra.mxu0 %v80
  %154 = vmatprep.subr.mxu0 0.0
  %155 = vmatpush2.msra.mxu0 %v79
  %156 = vmatprep.subr.mxu0 0.0
  %157 = vmatpush2.msra.mxu0 %v78
  %158 = vmatprep.subr.mxu0 0.0
  %159 = vmatpush2.msra.mxu0 %v77
  %160 = vmatprep.subr.mxu0 0.0
  %161 = vmatpush2.msra.mxu0 %v76
  %162 = vmatprep.subr.mxu0 0.0
  %163 = vmatpush2.msra.mxu0 %v75
  %164 = vmatprep.subr.mxu0 0.0
  %165 = vmatpush2.msra.mxu0 %v74
  %166 = vmatprep.subr.mxu0 0.0
  %167 = vmatpush2.msra.mxu0 %v73
  %168 = vmatprep.subr.mxu0 0.0
  %169 = vmatpush2.msra.mxu0 %v72
  %170 = vmatprep.subr.mxu0 0.0
  %171 = vmatpush2.msra.mxu0 %v71
  %172 = vmatprep.subr.mxu0 0.0
  %173 = vmatpush2.msra.mxu0 %v70
  %174 = vmatprep.subr.mxu0 0.0
  %175 = vmatpush2.msra.mxu0 %v69
  %176 = vmatprep.subr.mxu0 0.0
  %177 = vmatpush2.msra.mxu0 %v68
  %178 = vmatprep.subr.mxu0 0.0
  %179 = vmatpush2.msra.mxu0 %v67
  %180 = vmatprep.mubr.f32.mxu0 %v36
  %181 = vmatmul.mubr.f32.gmra.mxu0 %v35
  %v182 = vpop.f32.mrf.mxu0
  %v183 = vadd.f32 0.0, %v182
  %v184 = vpop.f32.mrf.mxu0
  %185 = vmatprep.mubr.f32.mxu0 %v40
  %186 = vmatmul.mubr.f32.gmra.mxu0 %v39
  %v187 = vpop.f32.mrf.mxu0
  %v188 = vadd.f32 0.0, %v187
  %v189 = vpop.f32.mrf.mxu0
  %190 = vmatprep.mubr.f32.mxu0 %v44
  %191 = vmatmul.mubr.f32.gmra.mxu0 %v43
  %v192 = vpop.f32.mrf.mxu0
  %v193 = vadd.f32 0.0, %v192
  %v194 = vpop.f32.mrf.mxu0
  %195 = vmatprep.mubr.f32.mxu0 %v48
  %196 = vmatmul.mubr.f32.gmra.mxu0 %v47
  %v197 = vpop.f32.mrf.mxu0
  %v198 = vadd.f32 0.0, %v197
  %v199 = vpop.f32.mrf.mxu0
  %200 = vdwg.mxu0
  %201 = vmatprep.subr.mxu0 0.0
  %202 = vmatpush1.msra.mxu0 %v98
  %203 = vmatprep.subr.mxu0 0.0
  %204 = vmatpush1.msra.mxu0 %v97
  %205 = vmatprep.subr.mxu0 0.0
  %206 = vmatpush1.msra.mxu0 %v96
  %207 = vmatprep.subr.mxu0 0.0
  %208 = vmatpush1.msra.mxu0 %v95
  %209 = vmatprep.subr.mxu0 0.0
  %210 = vmatpush1.msra.mxu0 %v94
  %211 = vmatprep.subr.mxu0 0.0
  %212 = vmatpush1.msra.mxu0 %v93
  %213 = vmatprep.subr.mxu0 0.0
  %214 = vmatpush1.msra.mxu0 %v92
  %215 = vmatprep.subr.mxu0 0.0
  %216 = vmatpush1.msra.mxu0 %v91
  %217 = vmatprep.subr.mxu0 0.0
  %218 = vmatpush1.msra.mxu0 %v90
  %219 = vmatprep.subr.mxu0 0.0
  %220 = vmatpush1.msra.mxu0 %v89
  %221 = vmatprep.subr.mxu0 0.0
  %222 = vmatpush1.msra.mxu0 %v88
  %223 = vmatprep.subr.mxu0 0.0
  %224 = vmatpush1.msra.mxu0 %v87
  %225 = vmatprep.subr.mxu0 0.0
  %226 = vmatpush1.msra.mxu0 %v86
  %227 = vmatprep.subr.mxu0 0.0
  %228 = vmatpush1.msra.mxu0 %v85
  %229 = vmatprep.subr.mxu0 0.0
  %230 = vmatpush1.msra.mxu0 %v84
  %231 = vmatprep.subr.mxu0 0.0
  %232 = vmatpush1.msra.mxu0 %v83
  %233 = vmatprep.subr.mxu0 0.0
  %234 = vmatpush2.msra.mxu0 %v114
  %235 = vmatprep.subr.mxu0 0.0
  %236 = vmatpush2.msra.mxu0 %v113
  %237 = vmatprep.subr.mxu0 0.0
  %238 = vmatpush2.msra.mxu0 %v112
  %239 = vmatprep.subr.mxu0 0.0
  %240 = vmatpush2.msra.mxu0 %v111
  %241 = vmatprep.subr.mxu0 0.0
  %242 = vmatpush2.msra.mxu0 %v110
  %243 = vmatprep.subr.mxu0 0.0
  %244 = vmatpush2.msra.mxu0 %v109
  %245 = vmatprep.subr.mxu0 0.0
  %246 = vmatpush2.msra.mxu0 %v108
  %247 = vmatprep.subr.mxu0 0.0
  %248 = vmatpush2.msra.mxu0 %v107
  %249 = vmatprep.subr.mxu0 0.0
  %250 = vmatpush2.msra.mxu0 %v106
  %251 = vmatprep.subr.mxu0 0.0
  %252 = vmatpush2.msra.mxu0 %v105
  %253 = vmatprep.subr.mxu0 0.0
  %254 = vmatpush2.msra.mxu0 %v104
  %255 = vmatprep.subr.mxu0 0.0
  %256 = vmatpush2.msra.mxu0 %v103
  %257 = vmatprep.subr.mxu0 0.0
  %258 = vmatpush2.msra.mxu0 %v102
  %259 = vmatprep.subr.mxu0 0.0
  %260 = vmatpush2.msra.mxu0 %v101
  %261 = vmatprep.subr.mxu0 0.0
  %262 = vmatpush2.msra.mxu0 %v100
  %263 = vmatprep.subr.mxu0 0.0
  %264 = vmatpush2.msra.mxu0 %v99
  %265 = vmatprep.mubr.f32.mxu0 %v38
  %266 = vmatmul.mubr.f32.gmra.mxu0 %v37
  %v267 = vpop.f32.mrf.mxu0
  %v268 = vadd.f32 %v183, %v267
  %v269 = vpop.f32.mrf.mxu0
  %270 = vmatprep.mubr.f32.mxu0 %v42
  %271 = vmatmul.mubr.f32.gmra.mxu0 %v41
  %v272 = vpop.f32.mrf.mxu0
  %v273 = vadd.f32 %v188, %v272
  %v274 = vpop.f32.mrf.mxu0
  %275 = vmatprep.mubr.f32.mxu0 %v46
  %276 = vmatmul.mubr.f32.gmra.mxu0 %v45
  %v277 = vpop.f32.mrf.mxu0
  %v278 = vadd.f32 %v193, %v277
  %v279 = vpop.f32.mrf.mxu0
  %280 = vmatprep.mubr.f32.mxu0 %v50
  %281 = vmatmul.mubr.f32.gmra.mxu0 %v49
  %v282 = vpop.f32.mrf.mxu0
  %v283 = vadd.f32 %v198, %v282
  %v284 = vpop.f32.mrf.mxu0
  %285 = vdwg.mxu0
  %v286 = vld [vmem:[%s3] sm:$0xff]
  %v287 = vld [vmem:[%s3 + $0x8] sm:$0xff]
  %v288 = vld [vmem:[%s3 + $0x10] sm:$0xff]
  %v289 = vld [vmem:[%s3 + $0x18] sm:$0xff]
  %v290 = vld [vmem:[%s4] sm:$0xff]
  %v291 = vld [vmem:[%s4 + $0x8] sm:$0xff]
  %v292 = vld [vmem:[%s4 + $0x10] sm:$0xff]
  %v293 = vld [vmem:[%s4 + $0x18] sm:$0xff]
  %295 = vset.pattern.permute.xlu0 0
  %296 = vperm.xlu0 %295, %v290
  %v297 = vpop.permute.xlu0 %296
  %300 = vset.pattern.permute.xlu0 0
  %301 = vperm.xlu0 %300, %v291
  %v302 = vpop.permute.xlu0 %301
  %305 = vset.pattern.permute.xlu0 0
  %306 = vperm.xlu0 %305, %v292
  %v307 = vpop.permute.xlu0 %306
  %310 = vset.pattern.permute.xlu0 0
  %311 = vperm.xlu0 %310, %v293
  %v312 = vpop.permute.xlu0 %311
  %vm314 = vcmask 261120
  %v316 = vsel %vm314, %v286, 0
  %v319 = vsel %vm314, %v287, 0
  %v322 = vsel %vm314, %v288, 0
  %v325 = vsel %vm314, %v289, 0
  %327 = vmatprep.subr.mxu0 0.0
  %328 = vmatpush1.msra.mxu0 0.0
  %329 = vmatprep.subr.mxu0 0.0
  %330 = vmatpush1.msra.mxu0 0.0
  %331 = vmatprep.subr.mxu0 0.0
  %332 = vmatpush1.msra.mxu0 0.0
  %333 = vmatprep.subr.mxu0 0.0
  %334 = vmatpush1.msra.mxu0 0.0
  %335 = vmatprep.subr.mxu0 0.0
  %336 = vmatpush1.msra.mxu0 0.0
  %337 = vmatprep.subr.mxu0 0.0
  %338 = vmatpush1.msra.mxu0 0.0
  %339 = vmatprep.subr.mxu0 0.0
  %340 = vmatpush1.msra.mxu0 0.0
  %341 = vmatprep.subr.mxu0 0.0
  %342 = vmatpush1.msra.mxu0 0.0
  %343 = vmatprep.subr.mxu0 0.0
  %344 = vmatpush1.msra.mxu0 0.0
  %345 = vmatprep.subr.mxu0 0.0
  %346 = vmatpush1.msra.mxu0 0.0
  %347 = vmatprep.subr.mxu0 0.0
  %348 = vmatpush1.msra.mxu0 0.0
  %349 = vmatprep.subr.mxu0 0.0
  %350 = vmatpush1.msra.mxu0 0.0
  %351 = vmatprep.subr.mxu0 0.0
  %352 = vmatpush1.msra.mxu0 %v283
  %353 = vmatprep.subr.mxu0 0.0
  %354 = vmatpush1.msra.mxu0 %v278
  %355 = vmatprep.subr.mxu0 0.0
  %356 = vmatpush1.msra.mxu0 %v273
  %357 = vmatprep.subr.mxu0 0.0
  %358 = vmatpush1.msra.mxu0 %v268
  %359 = vmatprep.subr.mxu0 0.0
  %360 = vmatpush2.msra.mxu0 0.0
  %361 = vmatprep.subr.mxu0 0.0
  %362 = vmatpush2.msra.mxu0 0.0
  %363 = vmatprep.subr.mxu0 0.0
  %364 = vmatpush2.msra.mxu0 0.0
  %365 = vmatprep.subr.mxu0 0.0
  %366 = vmatpush2.msra.mxu0 0.0
  %367 = vmatprep.subr.mxu0 0.0
  %368 = vmatpush2.msra.mxu0 0.0
  %369 = vmatprep.subr.mxu0 0.0
  %370 = vmatpush2.msra.mxu0 0.0
  %371 = vmatprep.subr.mxu0 0.0
  %372 = vmatpush2.msra.mxu0 0.0
  %373 = vmatprep.subr.mxu0 0.0
  %374 = vmatpush2.msra.mxu0 0.0
  %375 = vmatprep.subr.mxu0 0.0
  %376 = vmatpush2.msra.mxu0 0.0
  %377 = vmatprep.subr.mxu0 0.0
  %378 = vmatpush2.msra.mxu0 0.0
  %379 = vmatprep.subr.mxu0 0.0
  %380 = vmatpush2.msra.mxu0 0.0
  %381 = vmatprep.subr.mxu0 0.0
  %382 = vmatpush2.msra.mxu0 0.0
  %383 = vmatprep.subr.mxu0 0.0
  %384 = vmatpush2.msra.mxu0 0.0
  %385 = vmatprep.subr.mxu0 0.0
  %386 = vmatpush2.msra.mxu0 0.0
  %387 = vmatprep.subr.mxu0 0.0
  %388 = vmatpush2.msra.mxu0 0.0
  %389 = vmatprep.subr.mxu0 0.0
  %390 = vmatpush2.msra.mxu0 0.0
  %391 = vmatprep.mubr.f32.mxu0 0.0
  %392 = vmatmul.mubr.f32.gmra.mxu0 %v316
  %v393 = vpop.f32.mrf.mxu0
  %v394 = vadd.f32 %v297, %v393
  %v395 = vpop.f32.mrf.mxu0
  %396 = vmatprep.mubr.f32.mxu0 0.0
  %397 = vmatmul.mubr.f32.gmra.mxu0 %v319
  %v398 = vpop.f32.mrf.mxu0
  %v399 = vadd.f32 %v302, %v398
  %v400 = vpop.f32.mrf.mxu0
  %401 = vmatprep.mubr.f32.mxu0 0.0
  %402 = vmatmul.mubr.f32.gmra.mxu0 %v322
  %v403 = vpop.f32.mrf.mxu0
  %v404 = vadd.f32 %v307, %v403
  %v405 = vpop.f32.mrf.mxu0
  %406 = vmatprep.mubr.f32.mxu0 0.0
  %407 = vmatmul.mubr.f32.gmra.mxu0 %v325
  %v408 = vpop.f32.mrf.mxu0
  %v409 = vadd.f32 %v312, %v408
  %v410 = vpop.f32.mrf.mxu0
  %411 = vdwg.mxu0
  %v412 = vsub.f32 0.0, %v394
  %v413 = vsub.f32 0.0, %v399
  %v414 = vsub.f32 0.0, %v404
  %v415 = vsub.f32 0.0, %v409
  %v416 = vmul.f32 %v412, 1.442695
  %v417 = vpow.pop %v416
  %v418 = vmul.f32 %v413, 1.442695
  %v419 = vpow.pop %v418
  %v420 = vmul.f32 %v414, 1.442695
  %v421 = vpow.pop %v420
  %v422 = vmul.f32 %v415, 1.442695
  %v423 = vpow.pop %v422
  %v424 = vadd.f32 %v417, 1.0
  %v425 = vadd.f32 %v419, 1.0
  %v426 = vadd.f32 %v421, 1.0
  %v427 = vadd.f32 %v423, 1.0
  %v428 = vrcp.pop %v424
  %v429 = vmul.f32 1.0, %v428
  %v430 = vrcp.pop %v425
  %v431 = vmul.f32 1.0, %v430
  %v432 = vrcp.pop %v426
  %v433 = vmul.f32 1.0, %v432
  %v434 = vrcp.pop %v427
  %v435 = vmul.f32 1.0, %v434
  %v437 = vcombine.high %v115, %v115
  %v439 = vunpack.c.l.s4 1983009808
  %v440 = vunpack.c.0.s8 %v439
  %v441 = vlaneseq
  %v442 = vshrl.u32 %v441, 7
  %v443 = vsub.s32 %v440, %v442
  %v444 = vrot.slane %v115, %v443
  %v446 = vunpack.c.l.s4 1983009808
  %v447 = vunpack.c.0.s8 %v446
  %v448 = vlaneseq
  %v449 = vshrl.u32 %v448, 7
  %v450 = vsub.s32 %v447, %v449
  %v451 = vrot.slane %v437, %v450
  %v452 = vcombine.high %v444, %v444
  %v453 = vcombine.high %v451, %v451
  %vm454 = vcmask 15360
  %v456 = vsel %vm454, %v429, 0
  %v459 = vsel %vm454, %v431, 0
  %v462 = vsel %vm454, %v433, 0
  %v465 = vsel %vm454, %v435, 0
  %vm467 = vcmask 1041408
  %v468 = vsel %vm467, %v444, 0
  %v470 = vsel %vm467, %v452, 0
  %v472 = vsel %vm467, %v451, 0
  %v474 = vsel %vm467, %v453, 0
  %476 = vmatprep.subr.mxu0 0.0
  %477 = vmatpush1.msra.mxu0 0.0
  %478 = vmatprep.subr.mxu0 0.0
  %479 = vmatpush1.msra.mxu0 0.0
  %480 = vmatprep.subr.mxu0 0.0
  %481 = vmatpush1.msra.mxu0 0.0
  %482 = vmatprep.subr.mxu0 0.0
  %483 = vmatpush1.msra.mxu0 0.0
  %484 = vmatprep.subr.mxu0 0.0
  %485 = vmatpush1.msra.mxu0 0.0
  %486 = vmatprep.subr.mxu0 0.0
  %487 = vmatpush1.msra.mxu0 0.0
  %488 = vmatprep.subr.mxu0 0.0
  %489 = vmatpush1.msra.mxu0 0.0
  %490 = vmatprep.subr.mxu0 0.0
  %491 = vmatpush1.msra.mxu0 0.0
  %492 = vmatprep.subr.mxu0 0.0
  %493 = vmatpush1.msra.mxu0 0.0
  %494 = vmatprep.subr.mxu0 0.0
  %495 = vmatpush1.msra.mxu0 0.0
  %496 = vmatprep.subr.mxu0 0.0
  %497 = vmatpush1.msra.mxu0 0.0
  %498 = vmatprep.subr.mxu0 0.0
  %499 = vmatpush1.msra.mxu0 0.0
  %500 = vmatprep.subr.mxu0 0.0
  %501 = vmatpush1.msra.mxu0 0.0
  %502 = vmatprep.subr.mxu0 0.0
  %503 = vmatpush1.msra.mxu0 0.0
  %504 = vmatprep.subr.mxu0 0.0
  %505 = vmatpush1.msra.mxu0 0.0
  %506 = vmatprep.subr.mxu0 %v470
  %507 = vmatpush1.msra.mxu0 %v468
  %508 = vmatprep.subr.mxu0 0.0
  %509 = vmatpush2.msra.mxu0 0.0
  %510 = vmatprep.subr.mxu0 0.0
  %511 = vmatpush2.msra.mxu0 0.0
  %512 = vmatprep.subr.mxu0 0.0
  %513 = vmatpush2.msra.mxu0 0.0
  %514 = vmatprep.subr.mxu0 0.0
  %515 = vmatpush2.msra.mxu0 0.0
  %516 = vmatprep.subr.mxu0 0.0
  %517 = vmatpush2.msra.mxu0 0.0
  %518 = vmatprep.subr.mxu0 0.0
  %519 = vmatpush2.msra.mxu0 0.0
  %520 = vmatprep.subr.mxu0 0.0
  %521 = vmatpush2.msra.mxu0 0.0
  %522 = vmatprep.subr.mxu0 0.0
  %523 = vmatpush2.msra.mxu0 0.0
  %524 = vmatprep.subr.mxu0 0.0
  %525 = vmatpush2.msra.mxu0 0.0
  %526 = vmatprep.subr.mxu0 0.0
  %527 = vmatpush2.msra.mxu0 0.0
  %528 = vmatprep.subr.mxu0 0.0
  %529 = vmatpush2.msra.mxu0 0.0
  %530 = vmatprep.subr.mxu0 0.0
  %531 = vmatpush2.msra.mxu0 0.0
  %532 = vmatprep.subr.mxu0 0.0
  %533 = vmatpush2.msra.mxu0 0.0
  %534 = vmatprep.subr.mxu0 0.0
  %535 = vmatpush2.msra.mxu0 0.0
  %536 = vmatprep.subr.mxu0 0.0
  %537 = vmatpush2.msra.mxu0 0.0
  %538 = vmatprep.subr.mxu0 0.0
  %539 = vmatpush2.msra.mxu0 0.0
  %540 = vmatprep.mubr.f32.mxu0 0.0
  %541 = vmatmul.mubr.f32.gmra.mxu0 %v456
  %v542 = vpop.f32.mrf.mxu0
  %v543 = vadd.f32 0.0, %v542
  %v544 = vpop.f32.mrf.mxu0
  %v545 = vadd.f32 0.0, %v544
  %546 = vmatprep.mubr.f32.mxu0 0.0
  %547 = vmatmul.mubr.f32.gmra.mxu0 %v459
  %v548 = vpop.f32.mrf.mxu0
  %v549 = vadd.f32 0.0, %v548
  %v550 = vpop.f32.mrf.mxu0
  %v551 = vadd.f32 0.0, %v550
  %552 = vmatprep.mubr.f32.mxu0 0.0
  %553 = vmatmul.mubr.f32.gmra.mxu0 %v462
  %v554 = vpop.f32.mrf.mxu0
  %v555 = vadd.f32 0.0, %v554
  %v556 = vpop.f32.mrf.mxu0
  %v557 = vadd.f32 0.0, %v556
  %558 = vmatprep.mubr.f32.mxu0 0.0
  %559 = vmatmul.mubr.f32.gmra.mxu0 %v465
  %v560 = vpop.f32.mrf.mxu0
  %v561 = vadd.f32 0.0, %v560
  %v562 = vpop.f32.mrf.mxu0
  %v563 = vadd.f32 0.0, %v562
  %564 = vdwg.mxu0
  %565 = vmatprep.subr.mxu0 0.0
  %566 = vmatpush1.msra.mxu0 0.0
  %567 = vmatprep.subr.mxu0 0.0
  %568 = vmatpush1.msra.mxu0 0.0
  %569 = vmatprep.subr.mxu0 0.0
  %570 = vmatpush1.msra.mxu0 0.0
  %571 = vmatprep.subr.mxu0 0.0
  %572 = vmatpush1.msra.mxu0 0.0
  %573 = vmatprep.subr.mxu0 0.0
  %574 = vmatpush1.msra.mxu0 0.0
  %575 = vmatprep.subr.mxu0 0.0
  %576 = vmatpush1.msra.mxu0 0.0
  %577 = vmatprep.subr.mxu0 0.0
  %578 = vmatpush1.msra.mxu0 0.0
  %579 = vmatprep.subr.mxu0 0.0
  %580 = vmatpush1.msra.mxu0 0.0
  %581 = vmatprep.subr.mxu0 0.0
  %582 = vmatpush1.msra.mxu0 0.0
  %583 = vmatprep.subr.mxu0 0.0
  %584 = vmatpush1.msra.mxu0 0.0
  %585 = vmatprep.subr.mxu0 0.0
  %586 = vmatpush1.msra.mxu0 0.0
  %587 = vmatprep.subr.mxu0 0.0
  %588 = vmatpush1.msra.mxu0 0.0
  %589 = vmatprep.subr.mxu0 0.0
  %590 = vmatpush1.msra.mxu0 0.0
  %591 = vmatprep.subr.mxu0 0.0
  %592 = vmatpush1.msra.mxu0 0.0
  %593 = vmatprep.subr.mxu0 0.0
  %594 = vmatpush1.msra.mxu0 0.0
  %595 = vmatprep.subr.mxu0 %v474
  %596 = vmatpush1.msra.mxu0 %v472
  %597 = vmatprep.subr.mxu0 0.0
  %598 = vmatpush2.msra.mxu0 0.0
  %599 = vmatprep.subr.mxu0 0.0
  %600 = vmatpush2.msra.mxu0 0.0
  %601 = vmatprep.subr.mxu0 0.0
  %602 = vmatpush2.msra.mxu0 0.0
  %603 = vmatprep.subr.mxu0 0.0
  %604 = vmatpush2.msra.mxu0 0.0
  %605 = vmatprep.subr.mxu0 0.0
  %606 = vmatpush2.msra.mxu0 0.0
  %607 = vmatprep.subr.mxu0 0.0
  %608 = vmatpush2.msra.mxu0 0.0
  %609 = vmatprep.subr.mxu0 0.0
  %610 = vmatpush2.msra.mxu0 0.0
  %611 = vmatprep.subr.mxu0 0.0
  %612 = vmatpush2.msra.mxu0 0.0
  %613 = vmatprep.subr.mxu0 0.0
  %614 = vmatpush2.msra.mxu0 0.0
  %615 = vmatprep.subr.mxu0 0.0
  %616 = vmatpush2.msra.mxu0 0.0
  %617 = vmatprep.subr.mxu0 0.0
  %618 = vmatpush2.msra.mxu0 0.0
  %619 = vmatprep.subr.mxu0 0.0
  %620 = vmatpush2.msra.mxu0 0.0
  %621 = vmatprep.subr.mxu0 0.0
  %622 = vmatpush2.msra.mxu0 0.0
  %623 = vmatprep.subr.mxu0 0.0
  %624 = vmatpush2.msra.mxu0 0.0
  %625 = vmatprep.subr.mxu0 0.0
  %626 = vmatpush2.msra.mxu0 0.0
  %627 = vmatprep.subr.mxu0 0.0
  %628 = vmatpush2.msra.mxu0 0.0
  %629 = vmatprep.mubr.f32.mxu0 0.0
  %630 = vmatmul.mubr.f32.gmra.mxu0 %v456
  %v631 = vpop.f32.mrf.mxu0
  %v632 = vadd.f32 0.0, %v631
  %v633 = vpop.f32.mrf.mxu0
  %v634 = vadd.f32 0.0, %v633
  %635 = vmatprep.mubr.f32.mxu0 0.0
  %636 = vmatmul.mubr.f32.gmra.mxu0 %v459
  %v637 = vpop.f32.mrf.mxu0
  %v638 = vadd.f32 0.0, %v637
  %v639 = vpop.f32.mrf.mxu0
  %v640 = vadd.f32 0.0, %v639
  %641 = vmatprep.mubr.f32.mxu0 0.0
  %642 = vmatmul.mubr.f32.gmra.mxu0 %v462
  %v643 = vpop.f32.mrf.mxu0
  %v644 = vadd.f32 0.0, %v643
  %v645 = vpop.f32.mrf.mxu0
  %v646 = vadd.f32 0.0, %v645
  %647 = vmatprep.mubr.f32.mxu0 0.0
  %648 = vmatmul.mubr.f32.gmra.mxu0 %v465
  %v649 = vpop.f32.mrf.mxu0
  %v650 = vadd.f32 0.0, %v649
  %v651 = vpop.f32.mrf.mxu0
  %v652 = vadd.f32 0.0, %v651
  %653 = vdwg.mxu0
  %v654 = vmul.f32 %v35, %v543
  %v655 = vmul.f32 %v36, %v545
  %v656 = vmul.f32 %v37, %v632
  %v657 = vmul.f32 %v38, %v634
  %v658 = vmul.f32 %v39, %v549
  %v659 = vmul.f32 %v40, %v551
  %v660 = vmul.f32 %v41, %v638
  %v661 = vmul.f32 %v42, %v640
  %v662 = vmul.f32 %v43, %v555
  %v663 = vmul.f32 %v44, %v557
  %v664 = vmul.f32 %v45, %v644
  %v665 = vmul.f32 %v46, %v646
  %v666 = vmul.f32 %v47, %v561
  %v667 = vmul.f32 %v48, %v563
  %v668 = vmul.f32 %v49, %v650
  %v669 = vmul.f32 %v50, %v652
  %v670 = vadd.f32 %v654, %v658
  %v671 = vadd.f32 %v670, %v662
  %v672 = vadd.f32 %v671, %v666
  %v673 = vrot.slane %v672, 4
  %v674 = vadd.f32 %v672, %v673
  %v675 = vrot.slane %v674, 2
  %v676 = vadd.f32 %v674, %v675
  %v677 = vrot.slane %v676, 1
  %v678 = vadd.f32 %v676, %v677
  %v679 = vadd.f32 %v655, %v659
  %v680 = vadd.f32 %v679, %v663
  %v681 = vadd.f32 %v680, %v667
  %v682 = vrot.slane %v681, 4
  %v683 = vadd.f32 %v681, %v682
  %v684 = vrot.slane %v683, 2
  %v685 = vadd.f32 %v683, %v684
  %v686 = vrot.slane %v685, 1
  %v687 = vadd.f32 %v685, %v686
  %v688 = vadd.f32 %v656, %v660
  %v689 = vadd.f32 %v688, %v664
  %v690 = vadd.f32 %v689, %v668
  %v691 = vrot.slane %v690, 4
  %v692 = vadd.f32 %v690, %v691
  %v693 = vrot.slane %v692, 2
  %v694 = vadd.f32 %v692, %v693
  %v695 = vrot.slane %v694, 1
  %v696 = vadd.f32 %v694, %v695
  %v697 = vadd.f32 %v657, %v661
  %v698 = vadd.f32 %v697, %v665
  %v699 = vadd.f32 %v698, %v669
  %v700 = vrot.slane %v699, 4
  %v701 = vadd.f32 %v699, %v700
  %v702 = vrot.slane %v701, 2
  %v703 = vadd.f32 %v701, %v702
  %v704 = vrot.slane %v703, 1
  %v705 = vadd.f32 %v703, %v704
  %v706 = vrcp.pop 32.0
  %v707 = vmul.f32 %v678, %v706
  %v708 = vmul.f32 %v687, %v706
  %v709 = vmul.f32 %v696, %v706
  %v710 = vmul.f32 %v705, %v706
  %v711 = vsub.f32 0.0, %v707
  %v712 = vsub.f32 0.0, %v708
  %v713 = vsub.f32 0.0, %v709
  %v714 = vsub.f32 0.0, %v710
  %v715 = vmul.f32 %v711, 1.442695
  %v716 = vpow.pop %v715
  %v717 = vmul.f32 %v712, 1.442695
  %v718 = vpow.pop %v717
  %v719 = vmul.f32 %v713, 1.442695
  %v720 = vpow.pop %v719
  %v721 = vmul.f32 %v714, 1.442695
  %v722 = vpow.pop %v721
  %v723 = vadd.f32 %v716, 1.0
  %v724 = vadd.f32 %v718, 1.0
  %v725 = vadd.f32 %v720, 1.0
  %v726 = vadd.f32 %v722, 1.0
  %v727 = vrcp.pop %v723
  %v728 = vmul.f32 1.0, %v727
  %v729 = vrcp.pop %v724
  %v730 = vmul.f32 1.0, %v729
  %v731 = vrcp.pop %v725
  %v732 = vmul.f32 1.0, %v731
  %v733 = vrcp.pop %v726
  %v734 = vmul.f32 1.0, %v733
  %v735 = vmul.f32 %v654, %v728
  %v736 = vmul.f32 %v655, %v730
  %v737 = vmul.f32 %v656, %v732
  %v738 = vmul.f32 %v657, %v734
  %v739 = vmul.f32 %v658, %v728
  %v740 = vmul.f32 %v659, %v730
  %v741 = vmul.f32 %v660, %v732
  %v742 = vmul.f32 %v661, %v734
  %v743 = vmul.f32 %v662, %v728
  %v744 = vmul.f32 %v663, %v730
  %v745 = vmul.f32 %v664, %v732
  %v746 = vmul.f32 %v665, %v734
  %v747 = vmul.f32 %v666, %v728
  %v748 = vmul.f32 %v667, %v730
  %v749 = vmul.f32 %v668, %v732
  %v750 = vmul.f32 %v669, %v734
  %v751 = vld [vmem:[%s5] sm:$0xff]
  %v752 = vld [vmem:[%s5 + $0x8] sm:$0xff]
  %v753 = vld [vmem:[%s5 + $0x10] sm:$0xf]
  %v754 = vld [vmem:[%s6] sm:$0xff]
  %v755 = vld [vmem:[%s6 + $0x8] sm:$0xff]
  %v756 = vld [vmem:[%s6 + $0x10] sm:$0xf]
  %758 = vset.pattern.permute.xlu0 0
  %759 = vperm.xlu0 %758, %v754
  %v760 = vpop.permute.xlu0 %759
  %763 = vset.pattern.permute.xlu0 0
  %764 = vperm.xlu0 %763, %v755
  %v765 = vpop.permute.xlu0 %764
  %768 = vset.pattern.permute.xlu0 0
  %769 = vperm.xlu0 %768, %v756
  %v770 = vpop.permute.xlu0 %769
  %v773 = vsel %vm314, %v751, 0
  %v776 = vsel %vm314, %v752, 0
  %v779 = vsel %vm314, %v753, 0
  %781 = vmatprep.subr.mxu0 0.0
  %782 = vmatpush1.msra.mxu0 0.0
  %783 = vmatprep.subr.mxu0 0.0
  %784 = vmatpush1.msra.mxu0 0.0
  %785 = vmatprep.subr.mxu0 0.0
  %786 = vmatpush1.msra.mxu0 0.0
  %787 = vmatprep.subr.mxu0 0.0
  %788 = vmatpush1.msra.mxu0 0.0
  %789 = vmatprep.subr.mxu0 0.0
  %790 = vmatpush1.msra.mxu0 0.0
  %791 = vmatprep.subr.mxu0 0.0
  %792 = vmatpush1.msra.mxu0 0.0
  %793 = vmatprep.subr.mxu0 0.0
  %794 = vmatpush1.msra.mxu0 0.0
  %795 = vmatprep.subr.mxu0 0.0
  %796 = vmatpush1.msra.mxu0 0.0
  %797 = vmatprep.subr.mxu0 0.0
  %798 = vmatpush1.msra.mxu0 0.0
  %799 = vmatprep.subr.mxu0 0.0
  %800 = vmatpush1.msra.mxu0 0.0
  %801 = vmatprep.subr.mxu0 0.0
  %802 = vmatpush1.msra.mxu0 0.0
  %803 = vmatprep.subr.mxu0 0.0
  %804 = vmatpush1.msra.mxu0 0.0
  %805 = vmatprep.subr.mxu0 %v748
  %806 = vmatpush1.msra.mxu0 %v747
  %807 = vmatprep.subr.mxu0 %v744
  %808 = vmatpush1.msra.mxu0 %v743
  %809 = vmatprep.subr.mxu0 %v740
  %810 = vmatpush1.msra.mxu0 %v739
  %811 = vmatprep.subr.mxu0 %v736
  %812 = vmatpush1.msra.mxu0 %v735
  %813 = vmatprep.subr.mxu0 0.0
  %814 = vmatpush2.msra.mxu0 0.0
  %815 = vmatprep.subr.mxu0 0.0
  %816 = vmatpush2.msra.mxu0 0.0
  %817 = vmatprep.subr.mxu0 0.0
  %818 = vmatpush2.msra.mxu0 0.0
  %819 = vmatprep.subr.mxu0 0.0
  %820 = vmatpush2.msra.mxu0 0.0
  %821 = vmatprep.subr.mxu0 0.0
  %822 = vmatpush2.msra.mxu0 0.0
  %823 = vmatprep.subr.mxu0 0.0
  %824 = vmatpush2.msra.mxu0 0.0
  %825 = vmatprep.subr.mxu0 0.0
  %826 = vmatpush2.msra.mxu0 0.0
  %827 = vmatprep.subr.mxu0 0.0
  %828 = vmatpush2.msra.mxu0 0.0
  %829 = vmatprep.subr.mxu0 0.0
  %830 = vmatpush2.msra.mxu0 0.0
  %831 = vmatprep.subr.mxu0 0.0
  %832 = vmatpush2.msra.mxu0 0.0
  %833 = vmatprep.subr.mxu0 0.0
  %834 = vmatpush2.msra.mxu0 0.0
  %835 = vmatprep.subr.mxu0 0.0
  %836 = vmatpush2.msra.mxu0 0.0
  %837 = vmatprep.subr.mxu0 0.0
  %838 = vmatpush2.msra.mxu0 0.0
  %839 = vmatprep.subr.mxu0 0.0
  %840 = vmatpush2.msra.mxu0 0.0
  %841 = vmatprep.subr.mxu0 0.0
  %842 = vmatpush2.msra.mxu0 0.0
  %843 = vmatprep.subr.mxu0 0.0
  %844 = vmatpush2.msra.mxu0 0.0
  %845 = vmatprep.mubr.f32.mxu0 0.0
  %846 = vmatmul.mubr.f32.gmra.mxu0 %v773
  %v847 = vpop.f32.mrf.mxu0
  %v848 = vadd.f32 %v760, %v847
  %v849 = vpop.f32.mrf.mxu0
  %v850 = vadd.f32 %v760, %v849
  %851 = vmatprep.mubr.f32.mxu0 0.0
  %852 = vmatmul.mubr.f32.gmra.mxu0 %v776
  %v853 = vpop.f32.mrf.mxu0
  %v854 = vadd.f32 %v765, %v853
  %v855 = vpop.f32.mrf.mxu0
  %v856 = vadd.f32 %v765, %v855
  %857 = vmatprep.mubr.f32.mxu0 0.0
  %858 = vmatmul.mubr.f32.gmra.mxu0 %v779
  %v859 = vpop.f32.mrf.mxu0
  %v860 = vadd.f32 %v770, %v859
  %v861 = vpop.f32.mrf.mxu0
  %v862 = vadd.f32 %v770, %v861
  %863 = vdwg.mxu0
  %864 = vmatprep.subr.mxu0 0.0
  %865 = vmatpush1.msra.mxu0 0.0
  %866 = vmatprep.subr.mxu0 0.0
  %867 = vmatpush1.msra.mxu0 0.0
  %868 = vmatprep.subr.mxu0 0.0
  %869 = vmatpush1.msra.mxu0 0.0
  %870 = vmatprep.subr.mxu0 0.0
  %871 = vmatpush1.msra.mxu0 0.0
  %872 = vmatprep.subr.mxu0 0.0
  %873 = vmatpush1.msra.mxu0 0.0
  %874 = vmatprep.subr.mxu0 0.0
  %875 = vmatpush1.msra.mxu0 0.0
  %876 = vmatprep.subr.mxu0 0.0
  %877 = vmatpush1.msra.mxu0 0.0
  %878 = vmatprep.subr.mxu0 0.0
  %879 = vmatpush1.msra.mxu0 0.0
  %880 = vmatprep.subr.mxu0 0.0
  %881 = vmatpush1.msra.mxu0 0.0
  %882 = vmatprep.subr.mxu0 0.0
  %883 = vmatpush1.msra.mxu0 0.0
  %884 = vmatprep.subr.mxu0 0.0
  %885 = vmatpush1.msra.mxu0 0.0
  %886 = vmatprep.subr.mxu0 0.0
  %887 = vmatpush1.msra.mxu0 0.0
  %888 = vmatprep.subr.mxu0 %v750
  %889 = vmatpush1.msra.mxu0 %v749
  %890 = vmatprep.subr.mxu0 %v746
  %891 = vmatpush1.msra.mxu0 %v745
  %892 = vmatprep.subr.mxu0 %v742
  %893 = vmatpush1.msra.mxu0 %v741
  %894 = vmatprep.subr.mxu0 %v738
  %895 = vmatpush1.msra.mxu0 %v737
  %896 = vmatprep.subr.mxu0 0.0
  %897 = vmatpush2.msra.mxu0 0.0
  %898 = vmatprep.subr.mxu0 0.0
  %899 = vmatpush2.msra.mxu0 0.0
  %900 = vmatprep.subr.mxu0 0.0
  %901 = vmatpush2.msra.mxu0 0.0
  %902 = vmatprep.subr.mxu0 0.0
  %903 = vmatpush2.msra.mxu0 0.0
  %904 = vmatprep.subr.mxu0 0.0
  %905 = vmatpush2.msra.mxu0 0.0
  %906 = vmatprep.subr.mxu0 0.0
  %907 = vmatpush2.msra.mxu0 0.0
  %908 = vmatprep.subr.mxu0 0.0
  %909 = vmatpush2.msra.mxu0 0.0
  %910 = vmatprep.subr.mxu0 0.0
  %911 = vmatpush2.msra.mxu0 0.0
  %912 = vmatprep.subr.mxu0 0.0
  %913 = vmatpush2.msra.mxu0 0.0
  %914 = vmatprep.subr.mxu0 0.0
  %915 = vmatpush2.msra.mxu0 0.0
  %916 = vmatprep.subr.mxu0 0.0
  %917 = vmatpush2.msra.mxu0 0.0
  %918 = vmatprep.subr.mxu0 0.0
  %919 = vmatpush2.msra.mxu0 0.0
  %920 = vmatprep.subr.mxu0 0.0
  %921 = vmatpush2.msra.mxu0 0.0
  %922 = vmatprep.subr.mxu0 0.0
  %923 = vmatpush2.msra.mxu0 0.0
  %924 = vmatprep.subr.mxu0 0.0
  %925 = vmatpush2.msra.mxu0 0.0
  %926 = vmatprep.subr.mxu0 0.0
  %927 = vmatpush2.msra.mxu0 0.0
  %928 = vmatprep.mubr.f32.mxu0 0.0
  %929 = vmatmul.mubr.f32.gmra.mxu0 %v773
  %v930 = vpop.f32.mrf.mxu0
  %v931 = vadd.f32 %v760, %v930
  %v932 = vpop.f32.mrf.mxu0
  %v933 = vadd.f32 %v760, %v932
  %934 = vmatprep.mubr.f32.mxu0 0.0
  %935 = vmatmul.mubr.f32.gmra.mxu0 %v776
  %v936 = vpop.f32.mrf.mxu0
  %v937 = vadd.f32 %v765, %v936
  %v938 = vpop.f32.mrf.mxu0
  %v939 = vadd.f32 %v765, %v938
  %940 = vmatprep.mubr.f32.mxu0 0.0
  %941 = vmatmul.mubr.f32.gmra.mxu0 %v779
  %v942 = vpop.f32.mrf.mxu0
  %v943 = vadd.f32 %v770, %v942
  %v944 = vpop.f32.mrf.mxu0
  %v945 = vadd.f32 %v770, %v944
  %946 = vdwg.mxu0
  %v947 = vmax.f32 %v848, %v850
  %948 = vmax.xlane.f32.xlu0 %v947
  %v949 = vpop.xlane.xlu0 %948
  %v950 = vmax.f32 %v854, %v856
  %951 = vmax.xlane.f32.xlu0 %v950
  %v952 = vpop.xlane.xlu0 %951
  %vm953 = vcmask 1043456
  %v954 = vsel %vm953, %v860, -inf
  %v955 = vsel %vm953, %v862, -inf
  %v956 = vmax.f32 %v954, %v955
  %957 = vmax.xlane.f32.xlu0 %v956
  %v958 = vpop.xlane.xlu0 %957
  %v959 = vld [vmem:[%s7] sm:$0xff]
  %v960 = vld [vmem:[%s7 + $0x8] sm:$0xff]
  %v961 = vld [vmem:[%s7 + $0x10] sm:$0xf]
  %vm962 = vcmask 162816
  %v964 = vsel %vm962, %v959, 0
  %v967 = vsel %vm962, %v960, 0
  %v970 = vsel %vm962, %v961, 0
  %v973 = vsel %vm953, %v958, 0
  %975 = vmatprep.subr.mxu0 0.0
  %976 = vmatpush1.msra.mxu0 0.0
  %977 = vmatprep.subr.mxu0 0.0
  %978 = vmatpush1.msra.mxu0 0.0
  %979 = vmatprep.subr.mxu0 0.0
  %980 = vmatpush1.msra.mxu0 0.0
  %981 = vmatprep.subr.mxu0 0.0
  %982 = vmatpush1.msra.mxu0 0.0
  %983 = vmatprep.subr.mxu0 0.0
  %984 = vmatpush1.msra.mxu0 0.0
  %985 = vmatprep.subr.mxu0 0.0
  %986 = vmatpush1.msra.mxu0 0.0
  %987 = vmatprep.subr.mxu0 0.0
  %988 = vmatpush1.msra.mxu0 0.0
  %989 = vmatprep.subr.mxu0 0.0
  %990 = vmatpush1.msra.mxu0 0.0
  %991 = vmatprep.subr.mxu0 0.0
  %992 = vmatpush1.msra.mxu0 0.0
  %993 = vmatprep.subr.mxu0 0.0
  %994 = vmatpush1.msra.mxu0 0.0
  %995 = vmatprep.subr.mxu0 0.0
  %996 = vmatpush1.msra.mxu0 0.0
  %997 = vmatprep.subr.mxu0 0.0
  %998 = vmatpush1.msra.mxu0 0.0
  %999 = vmatprep.subr.mxu0 0.0
  %1000 = vmatpush1.msra.mxu0 0.0
  %1001 = vmatprep.subr.mxu0 0.0
  %1002 = vmatpush1.msra.mxu0 %v973
  %1003 = vmatprep.subr.mxu0 0.0
  %1004 = vmatpush1.msra.mxu0 %v952
  %1005 = vmatprep.subr.mxu0 0.0
  %1006 = vmatpush1.msra.mxu0 %v949
  %1007 = vmatprep.subr.mxu0 0.0
  %1008 = vmatpush2.msra.mxu0 0.0
  %1009 = vmatprep.subr.mxu0 0.0
  %1010 = vmatpush2.msra.mxu0 0.0
  %1011 = vmatprep.subr.mxu0 0.0
  %1012 = vmatpush2.msra.mxu0 0.0
  %1013 = vmatprep.subr.mxu0 0.0
  %1014 = vmatpush2.msra.mxu0 0.0
  %1015 = vmatprep.subr.mxu0 0.0
  %1016 = vmatpush2.msra.mxu0 0.0
  %1017 = vmatprep.subr.mxu0 0.0
  %1018 = vmatpush2.msra.mxu0 0.0
  %1019 = vmatprep.subr.mxu0 0.0
  %1020 = vmatpush2.msra.mxu0 0.0
  %1021 = vmatprep.subr.mxu0 0.0
  %1022 = vmatpush2.msra.mxu0 0.0
  %1023 = vmatprep.subr.mxu0 0.0
  %1024 = vmatpush2.msra.mxu0 0.0
  %1025 = vmatprep.subr.mxu0 0.0
  %1026 = vmatpush2.msra.mxu0 0.0
  %1027 = vmatprep.subr.mxu0 0.0
  %1028 = vmatpush2.msra.mxu0 0.0
  %1029 = vmatprep.subr.mxu0 0.0
  %1030 = vmatpush2.msra.mxu0 0.0
  %1031 = vmatprep.subr.mxu0 0.0
  %1032 = vmatpush2.msra.mxu0 0.0
  %1033 = vmatprep.subr.mxu0 0.0
  %1034 = vmatpush2.msra.mxu0 0.0
  %1035 = vmatprep.subr.mxu0 0.0
  %1036 = vmatpush2.msra.mxu0 0.0
  %1037 = vmatprep.subr.mxu0 0.0
  %1038 = vmatpush2.msra.mxu0 0.0
  %1039 = vmatprep.mubr.f32.mxu0 0.0
  %1040 = vmatmul.mubr.f32.gmra.mxu0 %v964
  %v1041 = vpop.f32.mrf.mxu0
  %v1042 = vadd.f32 0.0, %v1041
  %v1043 = vpop.f32.mrf.mxu0
  %1044 = vmatprep.mubr.f32.mxu0 0.0
  %1045 = vmatmul.mubr.f32.gmra.mxu0 %v967
  %v1046 = vpop.f32.mrf.mxu0
  %v1047 = vadd.f32 0.0, %v1046
  %v1048 = vpop.f32.mrf.mxu0
  %1049 = vmatprep.mubr.f32.mxu0 0.0
  %1050 = vmatmul.mubr.f32.gmra.mxu0 %v970
  %v1051 = vpop.f32.mrf.mxu0
  %v1052 = vadd.f32 0.0, %v1051
  %v1053 = vpop.f32.mrf.mxu0
  %1054 = vdwg.mxu0
  %1056 = vset.pattern.permute.xlu0 0
  %1057 = vperm.xlu0 %1056, %v1042
  %v1058 = vpop.permute.xlu0 %1057
  %1061 = vset.pattern.permute.xlu0 0
  %1062 = vperm.xlu0 %1061, %v1047
  %v1063 = vpop.permute.xlu0 %1062
  %1066 = vset.pattern.permute.xlu0 0
  %1067 = vperm.xlu0 %1066, %v1052
  %v1068 = vpop.permute.xlu0 %1067
  %v1070 = vlaneseq
  %v1071 = vshrl.u32 %v1070, 7
  %v1072 = vsub.s32 0, %v1071
  %v1073 = vrot.slane %v115, %v1072
  %v1074 = vlaneseq
  %v1075 = vshrl.u32 %v1074, 7
  %v1076 = vsub.s32 2, %v1075
  %v1077 = vrot.slane %v115, %v1076
  %v1078 = vlaneseq
  %v1079 = vshrl.u32 %v1078, 7
  %v1080 = vsub.s32 4, %v1079
  %v1081 = vrot.slane %v115, %v1080
  %v1082 = vlaneseq
  %v1083 = vshrl.u32 %v1082, 7
  %v1084 = vsub.s32 6, %v1083
  %v1085 = vrot.slane %v115, %v1084
  %v1090 = vlaneseq
  %v1091 = vshrl.u32 %v1090, 7
  %v1092 = vsub.s32 0, %v1091
  %v1093 = vrot.slane %v1073, %v1092
  %v1094 = vlaneseq
  %v1095 = vshrl.u32 %v1094, 7
  %v1096 = vsub.s32 0, %v1095
  %v1097 = vrot.slane %v1077, %v1096
  %v1098 = vlaneseq
  %v1099 = vshrl.u32 %v1098, 7
  %v1100 = vsub.s32 0, %v1099
  %v1101 = vrot.slane %v1081, %v1100
  %v1102 = vlaneseq
  %v1103 = vshrl.u32 %v1102, 7
  %v1104 = vsub.s32 0, %v1103
  %v1105 = vrot.slane %v1085, %v1104
  %v1106 = vmul.f32 %v1058, %v1093
  %v1107 = vmul.f32 %v1058, %v1097
  %v1108 = vmul.f32 %v1058, %v1101
  %v1109 = vmul.f32 %v1058, %v1105
  %v1110 = vmul.f32 %v1063, %v1093
  %v1111 = vmul.f32 %v1063, %v1097
  %v1112 = vmul.f32 %v1063, %v1101
  %v1113 = vmul.f32 %v1063, %v1105
  %v1114 = vmul.f32 %v1068, %v1093
  %v1115 = vmul.f32 %v1068, %v1097
  %v1116 = vmul.f32 %v1068, %v1101
  %v1117 = vmul.f32 %v1068, %v1105
  %v1118 = vmax.f32 %v931, %v933
  %1119 = vmax.xlane.f32.xlu0 %v1118
  %v1120 = vpop.xlane.xlu0 %1119
  %v1121 = vmax.f32 %v937, %v939
  %1122 = vmax.xlane.f32.xlu0 %v1121
  %v1123 = vpop.xlane.xlu0 %1122
  %v1124 = vsel %vm953, %v943, -inf
  %v1125 = vsel %vm953, %v945, -inf
  %v1126 = vmax.f32 %v1124, %v1125
  %1127 = vmax.xlane.f32.xlu0 %v1126
  %v1128 = vpop.xlane.xlu0 %1127
  %v1130 = vsel %vm953, %v1128, 0
  %1132 = vmatprep.subr.mxu0 0.0
  %1133 = vmatpush1.msra.mxu0 0.0
  %1134 = vmatprep.subr.mxu0 0.0
  %1135 = vmatpush1.msra.mxu0 0.0
  %1136 = vmatprep.subr.mxu0 0.0
  %1137 = vmatpush1.msra.mxu0 0.0
  %1138 = vmatprep.subr.mxu0 0.0
  %1139 = vmatpush1.msra.mxu0 0.0
  %1140 = vmatprep.subr.mxu0 0.0
  %1141 = vmatpush1.msra.mxu0 0.0
  %1142 = vmatprep.subr.mxu0 0.0
  %1143 = vmatpush1.msra.mxu0 0.0
  %1144 = vmatprep.subr.mxu0 0.0
  %1145 = vmatpush1.msra.mxu0 0.0
  %1146 = vmatprep.subr.mxu0 0.0
  %1147 = vmatpush1.msra.mxu0 0.0
  %1148 = vmatprep.subr.mxu0 0.0
  %1149 = vmatpush1.msra.mxu0 0.0
  %1150 = vmatprep.subr.mxu0 0.0
  %1151 = vmatpush1.msra.mxu0 0.0
  %1152 = vmatprep.subr.mxu0 0.0
  %1153 = vmatpush1.msra.mxu0 0.0
  %1154 = vmatprep.subr.mxu0 0.0
  %1155 = vmatpush1.msra.mxu0 0.0
  %1156 = vmatprep.subr.mxu0 0.0
  %1157 = vmatpush1.msra.mxu0 0.0
  %1158 = vmatprep.subr.mxu0 0.0
  %1159 = vmatpush1.msra.mxu0 %v1130
  %1160 = vmatprep.subr.mxu0 0.0
  %1161 = vmatpush1.msra.mxu0 %v1123
  %1162 = vmatprep.subr.mxu0 0.0
  %1163 = vmatpush1.msra.mxu0 %v1120
  %1164 = vmatprep.subr.mxu0 0.0
  %1165 = vmatpush2.msra.mxu0 0.0
  %1166 = vmatprep.subr.mxu0 0.0
  %1167 = vmatpush2.msra.mxu0 0.0
  %1168 = vmatprep.subr.mxu0 0.0
  %1169 = vmatpush2.msra.mxu0 0.0
  %1170 = vmatprep.subr.mxu0 0.0
  %1171 = vmatpush2.msra.mxu0 0.0
  %1172 = vmatprep.subr.mxu0 0.0
  %1173 = vmatpush2.msra.mxu0 0.0
  %1174 = vmatprep.subr.mxu0 0.0
  %1175 = vmatpush2.msra.mxu0 0.0
  %1176 = vmatprep.subr.mxu0 0.0
  %1177 = vmatpush2.msra.mxu0 0.0
  %1178 = vmatprep.subr.mxu0 0.0
  %1179 = vmatpush2.msra.mxu0 0.0
  %1180 = vmatprep.subr.mxu0 0.0
  %1181 = vmatpush2.msra.mxu0 0.0
  %1182 = vmatprep.subr.mxu0 0.0
  %1183 = vmatpush2.msra.mxu0 0.0
  %1184 = vmatprep.subr.mxu0 0.0
  %1185 = vmatpush2.msra.mxu0 0.0
  %1186 = vmatprep.subr.mxu0 0.0
  %1187 = vmatpush2.msra.mxu0 0.0
  %1188 = vmatprep.subr.mxu0 0.0
  %1189 = vmatpush2.msra.mxu0 0.0
  %1190 = vmatprep.subr.mxu0 0.0
  %1191 = vmatpush2.msra.mxu0 0.0
  %1192 = vmatprep.subr.mxu0 0.0
  %1193 = vmatpush2.msra.mxu0 0.0
  %1194 = vmatprep.subr.mxu0 0.0
  %1195 = vmatpush2.msra.mxu0 0.0
  %1196 = vmatprep.mubr.f32.mxu0 0.0
  %1197 = vmatmul.mubr.f32.gmra.mxu0 %v964
  %v1198 = vpop.f32.mrf.mxu0
  %v1199 = vadd.f32 0.0, %v1198
  %v1200 = vpop.f32.mrf.mxu0
  %1201 = vmatprep.mubr.f32.mxu0 0.0
  %1202 = vmatmul.mubr.f32.gmra.mxu0 %v967
  %v1203 = vpop.f32.mrf.mxu0
  %v1204 = vadd.f32 0.0, %v1203
  %v1205 = vpop.f32.mrf.mxu0
  %1206 = vmatprep.mubr.f32.mxu0 0.0
  %1207 = vmatmul.mubr.f32.gmra.mxu0 %v970
  %v1208 = vpop.f32.mrf.mxu0
  %v1209 = vadd.f32 0.0, %v1208
  %v1210 = vpop.f32.mrf.mxu0
  %1211 = vdwg.mxu0
  %1213 = vset.pattern.permute.xlu0 0
  %1214 = vperm.xlu0 %1213, %v1199
  %v1215 = vpop.permute.xlu0 %1214
  %1218 = vset.pattern.permute.xlu0 0
  %1219 = vperm.xlu0 %1218, %v1204
  %v1220 = vpop.permute.xlu0 %1219
  %1223 = vset.pattern.permute.xlu0 0
  %1224 = vperm.xlu0 %1223, %v1209
  %v1225 = vpop.permute.xlu0 %1224
  %v1227 = vlaneseq
  %v1228 = vshrl.u32 %v1227, 7
  %v1229 = vsub.s32 1, %v1228
  %v1230 = vrot.slane %v115, %v1229
  %v1231 = vlaneseq
  %v1232 = vshrl.u32 %v1231, 7
  %v1233 = vsub.s32 3, %v1232
  %v1234 = vrot.slane %v115, %v1233
  %v1235 = vlaneseq
  %v1236 = vshrl.u32 %v1235, 7
  %v1237 = vsub.s32 5, %v1236
  %v1238 = vrot.slane %v115, %v1237
  %v1239 = vlaneseq
  %v1240 = vshrl.u32 %v1239, 7
  %v1241 = vsub.s32 7, %v1240
  %v1242 = vrot.slane %v115, %v1241
  %v1247 = vlaneseq
  %v1248 = vshrl.u32 %v1247, 7
  %v1249 = vsub.s32 1, %v1248
  %v1250 = vrot.slane %v1230, %v1249
  %v1251 = vlaneseq
  %v1252 = vshrl.u32 %v1251, 7
  %v1253 = vsub.s32 1, %v1252
  %v1254 = vrot.slane %v1234, %v1253
  %v1255 = vlaneseq
  %v1256 = vshrl.u32 %v1255, 7
  %v1257 = vsub.s32 1, %v1256
  %v1258 = vrot.slane %v1238, %v1257
  %v1259 = vlaneseq
  %v1260 = vshrl.u32 %v1259, 7
  %v1261 = vsub.s32 1, %v1260
  %v1262 = vrot.slane %v1242, %v1261
  %v1263 = vmul.f32 %v1215, %v1250
  %v1264 = vmul.f32 %v1215, %v1254
  %v1265 = vmul.f32 %v1215, %v1258
  %v1266 = vmul.f32 %v1215, %v1262
  %v1267 = vmul.f32 %v1220, %v1250
  %v1268 = vmul.f32 %v1220, %v1254
  %v1269 = vmul.f32 %v1220, %v1258
  %v1270 = vmul.f32 %v1220, %v1262
  %v1271 = vmul.f32 %v1225, %v1250
  %v1272 = vmul.f32 %v1225, %v1254
  %v1273 = vmul.f32 %v1225, %v1258
  %v1274 = vmul.f32 %v1225, %v1262
  %v1275 = vadd.f32 %v1106, %v1263
  %v1276 = vadd.f32 %v1107, %v1264
  %v1277 = vadd.f32 %v1108, %v1265
  %v1278 = vadd.f32 %v1109, %v1266
  %v1279 = vadd.f32 %v1110, %v1267
  %v1280 = vadd.f32 %v1111, %v1268
  %v1281 = vadd.f32 %v1112, %v1269
  %v1282 = vadd.f32 %v1113, %v1270
  %v1283 = vadd.f32 %v1114, %v1271
  %v1284 = vadd.f32 %v1115, %v1272
  %v1285 = vadd.f32 %v1116, %v1273
  %v1286 = vadd.f32 %v1117, %v1274
  %v1287 = vmul.f32 %v848, %v1275
  %v1288 = vmul.f32 %v850, %v1276
  %v1289 = vmul.f32 %v931, %v1277
  %v1290 = vmul.f32 %v933, %v1278
  %v1291 = vmul.f32 %v854, %v1279
  %v1292 = vmul.f32 %v856, %v1280
  %v1293 = vmul.f32 %v937, %v1281
  %v1294 = vmul.f32 %v939, %v1282
  %v1295 = vmul.f32 %v860, %v1283
  %v1296 = vmul.f32 %v862, %v1284
  %v1297 = vmul.f32 %v943, %v1285
  %v1298 = vmul.f32 %v945, %v1286
  %v1299 = vadd.f32 %v1287, %v1291
  %v1300 = vsel %vm953, %v1295, 0.0
  %v1301 = vadd.f32 %v1299, %v1300
  %v1302 = vrot.slane %v1301, 4
  %v1303 = vadd.f32 %v1301, %v1302
  %v1304 = vrot.slane %v1303, 2
  %v1305 = vadd.f32 %v1303, %v1304
  %v1306 = vrot.slane %v1305, 1
  %v1307 = vadd.f32 %v1305, %v1306
  %v1308 = vadd.f32 %v1288, %v1292
  %v1309 = vsel %vm953, %v1296, 0.0
  %v1310 = vadd.f32 %v1308, %v1309
  %v1311 = vrot.slane %v1310, 4
  %v1312 = vadd.f32 %v1310, %v1311
  %v1313 = vrot.slane %v1312, 2
  %v1314 = vadd.f32 %v1312, %v1313
  %v1315 = vrot.slane %v1314, 1
  %v1316 = vadd.f32 %v1314, %v1315
  %v1317 = vadd.f32 %v1289, %v1293
  %v1318 = vsel %vm953, %v1297, 0.0
  %v1319 = vadd.f32 %v1317, %v1318
  %v1320 = vrot.slane %v1319, 4
  %v1321 = vadd.f32 %v1319, %v1320
  %v1322 = vrot.slane %v1321, 2
  %v1323 = vadd.f32 %v1321, %v1322
  %v1324 = vrot.slane %v1323, 1
  %v1325 = vadd.f32 %v1323, %v1324
  %v1326 = vadd.f32 %v1290, %v1294
  %v1327 = vsel %vm953, %v1298, 0.0
  %v1328 = vadd.f32 %v1326, %v1327
  %v1329 = vrot.slane %v1328, 4
  %v1330 = vadd.f32 %v1328, %v1329
  %v1331 = vrot.slane %v1330, 2
  %v1332 = vadd.f32 %v1330, %v1331
  %v1333 = vrot.slane %v1332, 1
  %v1334 = vadd.f32 %v1332, %v1333
  %v1335 = vmul.f32 %v735, %v1307
  %v1336 = vmul.f32 %v736, %v1316
  %v1337 = vmul.f32 %v737, %v1325
  %v1338 = vmul.f32 %v738, %v1334
  %v1339 = vmul.f32 %v739, %v1307
  %v1340 = vmul.f32 %v740, %v1316
  %v1341 = vmul.f32 %v741, %v1325
  %v1342 = vmul.f32 %v742, %v1334
  %v1343 = vmul.f32 %v743, %v1307
  %v1344 = vmul.f32 %v744, %v1316
  %v1345 = vmul.f32 %v745, %v1325
  %v1346 = vmul.f32 %v746, %v1334
  %v1347 = vmul.f32 %v747, %v1307
  %v1348 = vmul.f32 %v748, %v1316
  %v1349 = vmul.f32 %v749, %v1325
  %v1350 = vmul.f32 %v750, %v1334
  %1351 = vmatprep.subr.mxu0 0.0
  %1352 = vmatpush1.msra.mxu0 %v66
  %1353 = vmatprep.subr.mxu0 0.0
  %1354 = vmatpush1.msra.mxu0 %v65
  %1355 = vmatprep.subr.mxu0 0.0
  %1356 = vmatpush1.msra.mxu0 %v64
  %1357 = vmatprep.subr.mxu0 0.0
  %1358 = vmatpush1.msra.mxu0 %v63
  %1359 = vmatprep.subr.mxu0 0.0
  %1360 = vmatpush1.msra.mxu0 %v62
  %1361 = vmatprep.subr.mxu0 0.0
  %1362 = vmatpush1.msra.mxu0 %v61
  %1363 = vmatprep.subr.mxu0 0.0
  %1364 = vmatpush1.msra.mxu0 %v60
  %1365 = vmatprep.subr.mxu0 0.0
  %1366 = vmatpush1.msra.mxu0 %v59
  %1367 = vmatprep.subr.mxu0 0.0
  %1368 = vmatpush1.msra.mxu0 %v58
  %1369 = vmatprep.subr.mxu0 0.0
  %1370 = vmatpush1.msra.mxu0 %v57
  %1371 = vmatprep.subr.mxu0 0.0
  %1372 = vmatpush1.msra.mxu0 %v56
  %1373 = vmatprep.subr.mxu0 0.0
  %1374 = vmatpush1.msra.mxu0 %v55
  %1375 = vmatprep.subr.mxu0 0.0
  %1376 = vmatpush1.msra.mxu0 %v54
  %1377 = vmatprep.subr.mxu0 0.0
  %1378 = vmatpush1.msra.mxu0 %v53
  %1379 = vmatprep.subr.mxu0 0.0
  %1380 = vmatpush1.msra.mxu0 %v52
  %1381 = vmatprep.subr.mxu0 0.0
  %1382 = vmatpush1.msra.mxu0 %v51
  %1383 = vmatprep.subr.mxu0 0.0
  %1384 = vmatpush2.msra.mxu0 %v82
  %1385 = vmatprep.subr.mxu0 0.0
  %1386 = vmatpush2.msra.mxu0 %v81
  %1387 = vmatprep.subr.mxu0 0.0
  %1388 = vmatpush2.msra.mxu0 %v80
  %1389 = vmatprep.subr.mxu0 0.0
  %1390 = vmatpush2.msra.mxu0 %v79
  %1391 = vmatprep.subr.mxu0 0.0
  %1392 = vmatpush2.msra.mxu0 %v78
  %1393 = vmatprep.subr.mxu0 0.0
  %1394 = vmatpush2.msra.mxu0 %v77
  %1395 = vmatprep.subr.mxu0 0.0
  %1396 = vmatpush2.msra.mxu0 %v76
  %1397 = vmatprep.subr.mxu0 0.0
  %1398 = vmatpush2.msra.mxu0 %v75
  %1399 = vmatprep.subr.mxu0 0.0
  %1400 = vmatpush2.msra.mxu0 %v74
  %1401 = vmatprep.subr.mxu0 0.0
  %1402 = vmatpush2.msra.mxu0 %v73
  %1403 = vmatprep.subr.mxu0 0.0
  %1404 = vmatpush2.msra.mxu0 %v72
  %1405 = vmatprep.subr.mxu0 0.0
  %1406 = vmatpush2.msra.mxu0 %v71
  %1407 = vmatprep.subr.mxu0 0.0
  %1408 = vmatpush2.msra.mxu0 %v70
  %1409 = vmatprep.subr.mxu0 0.0
  %1410 = vmatpush2.msra.mxu0 %v69
  %1411 = vmatprep.subr.mxu0 0.0
  %1412 = vmatpush2.msra.mxu0 %v68
  %1413 = vmatprep.subr.mxu0 0.0
  %1414 = vmatpush2.msra.mxu0 %v67
  %1415 = vmatprep.mubr.f32.mxu0 %v1336
  %1416 = vmatmul.mubr.f32.gmra.mxu0 %v1335
  %v1417 = vpop.f32.mrf.mxu0
  %v1418 = vadd.f32 0.0, %v1417
  %v1419 = vpop.f32.mrf.mxu0
  %1420 = vmatprep.mubr.f32.mxu0 %v1340
  %1421 = vmatmul.mubr.f32.gmra.mxu0 %v1339
  %v1422 = vpop.f32.mrf.mxu0
  %v1423 = vadd.f32 0.0, %v1422
  %v1424 = vpop.f32.mrf.mxu0
  %1425 = vmatprep.mubr.f32.mxu0 %v1344
  %1426 = vmatmul.mubr.f32.gmra.mxu0 %v1343
  %v1427 = vpop.f32.mrf.mxu0
  %v1428 = vadd.f32 0.0, %v1427
  %v1429 = vpop.f32.mrf.mxu0
  %1430 = vmatprep.mubr.f32.mxu0 %v1348
  %1431 = vmatmul.mubr.f32.gmra.mxu0 %v1347
  %v1432 = vpop.f32.mrf.mxu0
  %v1433 = vadd.f32 0.0, %v1432
  %v1434 = vpop.f32.mrf.mxu0
  %1435 = vdwg.mxu0
  %1436 = vmatprep.subr.mxu0 0.0
  %1437 = vmatpush1.msra.mxu0 %v98
  %1438 = vmatprep.subr.mxu0 0.0
  %1439 = vmatpush1.msra.mxu0 %v97
  %1440 = vmatprep.subr.mxu0 0.0
  %1441 = vmatpush1.msra.mxu0 %v96
  %1442 = vmatprep.subr.mxu0 0.0
  %1443 = vmatpush1.msra.mxu0 %v95
  %1444 = vmatprep.subr.mxu0 0.0
  %1445 = vmatpush1.msra.mxu0 %v94
  %1446 = vmatprep.subr.mxu0 0.0
  %1447 = vmatpush1.msra.mxu0 %v93
  %1448 = vmatprep.subr.mxu0 0.0
  %1449 = vmatpush1.msra.mxu0 %v92
  %1450 = vmatprep.subr.mxu0 0.0
  %1451 = vmatpush1.msra.mxu0 %v91
  %1452 = vmatprep.subr.mxu0 0.0
  %1453 = vmatpush1.msra.mxu0 %v90
  %1454 = vmatprep.subr.mxu0 0.0
  %1455 = vmatpush1.msra.mxu0 %v89
  %1456 = vmatprep.subr.mxu0 0.0
  %1457 = vmatpush1.msra.mxu0 %v88
  %1458 = vmatprep.subr.mxu0 0.0
  %1459 = vmatpush1.msra.mxu0 %v87
  %1460 = vmatprep.subr.mxu0 0.0
  %1461 = vmatpush1.msra.mxu0 %v86
  %1462 = vmatprep.subr.mxu0 0.0
  %1463 = vmatpush1.msra.mxu0 %v85
  %1464 = vmatprep.subr.mxu0 0.0
  %1465 = vmatpush1.msra.mxu0 %v84
  %1466 = vmatprep.subr.mxu0 0.0
  %1467 = vmatpush1.msra.mxu0 %v83
  %1468 = vmatprep.subr.mxu0 0.0
  %1469 = vmatpush2.msra.mxu0 %v114
  %1470 = vmatprep.subr.mxu0 0.0
  %1471 = vmatpush2.msra.mxu0 %v113
  %1472 = vmatprep.subr.mxu0 0.0
  %1473 = vmatpush2.msra.mxu0 %v112
  %1474 = vmatprep.subr.mxu0 0.0
  %1475 = vmatpush2.msra.mxu0 %v111
  %1476 = vmatprep.subr.mxu0 0.0
  %1477 = vmatpush2.msra.mxu0 %v110
  %1478 = vmatprep.subr.mxu0 0.0
  %1479 = vmatpush2.msra.mxu0 %v109
  %1480 = vmatprep.subr.mxu0 0.0
  %1481 = vmatpush2.msra.mxu0 %v108
  %1482 = vmatprep.subr.mxu0 0.0
  %1483 = vmatpush2.msra.mxu0 %v107
  %1484 = vmatprep.subr.mxu0 0.0
  %1485 = vmatpush2.msra.mxu0 %v106
  %1486 = vmatprep.subr.mxu0 0.0
  %1487 = vmatpush2.msra.mxu0 %v105
  %1488 = vmatprep.subr.mxu0 0.0
  %1489 = vmatpush2.msra.mxu0 %v104
  %1490 = vmatprep.subr.mxu0 0.0
  %1491 = vmatpush2.msra.mxu0 %v103
  %1492 = vmatprep.subr.mxu0 0.0
  %1493 = vmatpush2.msra.mxu0 %v102
  %1494 = vmatprep.subr.mxu0 0.0
  %1495 = vmatpush2.msra.mxu0 %v101
  %1496 = vmatprep.subr.mxu0 0.0
  %1497 = vmatpush2.msra.mxu0 %v100
  %1498 = vmatprep.subr.mxu0 0.0
  %1499 = vmatpush2.msra.mxu0 %v99
  %1500 = vmatprep.mubr.f32.mxu0 %v1338
  %1501 = vmatmul.mubr.f32.gmra.mxu0 %v1337
  %v1502 = vpop.f32.mrf.mxu0
  %v1503 = vadd.f32 %v1418, %v1502
  %v1504 = vpop.f32.mrf.mxu0
  %1505 = vmatprep.mubr.f32.mxu0 %v1342
  %1506 = vmatmul.mubr.f32.gmra.mxu0 %v1341
  %v1507 = vpop.f32.mrf.mxu0
  %v1508 = vadd.f32 %v1423, %v1507
  %v1509 = vpop.f32.mrf.mxu0
  %1510 = vmatprep.mubr.f32.mxu0 %v1346
  %1511 = vmatmul.mubr.f32.gmra.mxu0 %v1345
  %v1512 = vpop.f32.mrf.mxu0
  %v1513 = vadd.f32 %v1428, %v1512
  %v1514 = vpop.f32.mrf.mxu0
  %1515 = vmatprep.mubr.f32.mxu0 %v1350
  %1516 = vmatmul.mubr.f32.gmra.mxu0 %v1349
  %v1517 = vpop.f32.mrf.mxu0
  %v1518 = vadd.f32 %v1433, %v1517
  %v1519 = vpop.f32.mrf.mxu0
  %1520 = vdwg.mxu0
  %v1521 = vld [vmem:[%s8] sm:$0x1f]
  %v1522 = vld [vmem:[%s9] sm:$0x1f]
  %1524 = vset.pattern.permute.xlu0 0
  %1525 = vperm.xlu0 %1524, %v1522
  %v1526 = vpop.permute.xlu0 %1525
  %v1529 = vsel %vm314, %v1521, 0
  %1531 = vmatprep.subr.mxu0 0.0
  %1532 = vmatpush1.msra.mxu0 0.0
  %1533 = vmatprep.subr.mxu0 0.0
  %1534 = vmatpush1.msra.mxu0 0.0
  %1535 = vmatprep.subr.mxu0 0.0
  %1536 = vmatpush1.msra.mxu0 0.0
  %1537 = vmatprep.subr.mxu0 0.0
  %1538 = vmatpush1.msra.mxu0 0.0
  %1539 = vmatprep.subr.mxu0 0.0
  %1540 = vmatpush1.msra.mxu0 0.0
  %1541 = vmatprep.subr.mxu0 0.0
  %1542 = vmatpush1.msra.mxu0 0.0
  %1543 = vmatprep.subr.mxu0 0.0
  %1544 = vmatpush1.msra.mxu0 0.0
  %1545 = vmatprep.subr.mxu0 0.0
  %1546 = vmatpush1.msra.mxu0 0.0
  %1547 = vmatprep.subr.mxu0 0.0
  %1548 = vmatpush1.msra.mxu0 0.0
  %1549 = vmatprep.subr.mxu0 0.0
  %1550 = vmatpush1.msra.mxu0 0.0
  %1551 = vmatprep.subr.mxu0 0.0
  %1552 = vmatpush1.msra.mxu0 0.0
  %1553 = vmatprep.subr.mxu0 0.0
  %1554 = vmatpush1.msra.mxu0 0.0
  %1555 = vmatprep.subr.mxu0 0.0
  %1556 = vmatpush1.msra.mxu0 %v1518
  %1557 = vmatprep.subr.mxu0 0.0
  %1558 = vmatpush1.msra.mxu0 %v1513
  %1559 = vmatprep.subr.mxu0 0.0
  %1560 = vmatpush1.msra.mxu0 %v1508
  %1561 = vmatprep.subr.mxu0 0.0
  %1562 = vmatpush1.msra.mxu0 %v1503
  %1563 = vmatprep.subr.mxu0 0.0
  %1564 = vmatpush2.msra.mxu0 0.0
  %1565 = vmatprep.subr.mxu0 0.0
  %1566 = vmatpush2.msra.mxu0 0.0
  %1567 = vmatprep.subr.mxu0 0.0
  %1568 = vmatpush2.msra.mxu0 0.0
  %1569 = vmatprep.subr.mxu0 0.0
  %1570 = vmatpush2.msra.mxu0 0.0
  %1571 = vmatprep.subr.mxu0 0.0
  %1572 = vmatpush2.msra.mxu0 0.0
  %1573 = vmatprep.subr.mxu0 0.0
  %1574 = vmatpush2.msra.mxu0 0.0
  %1575 = vmatprep.subr.mxu0 0.0
  %1576 = vmatpush2.msra.mxu0 0.0
  %1577 = vmatprep.subr.mxu0 0.0
  %1578 = vmatpush2.msra.mxu0 0.0
  %1579 = vmatprep.subr.mxu0 0.0
  %1580 = vmatpush2.msra.mxu0 0.0
  %1581 = vmatprep.subr.mxu0 0.0
  %1582 = vmatpush2.msra.mxu0 0.0
  %1583 = vmatprep.subr.mxu0 0.0
  %1584 = vmatpush2.msra.mxu0 0.0
  %1585 = vmatprep.subr.mxu0 0.0
  %1586 = vmatpush2.msra.mxu0 0.0
  %1587 = vmatprep.subr.mxu0 0.0
  %1588 = vmatpush2.msra.mxu0 0.0
  %1589 = vmatprep.subr.mxu0 0.0
  %1590 = vmatpush2.msra.mxu0 0.0
  %1591 = vmatprep.subr.mxu0 0.0
  %1592 = vmatpush2.msra.mxu0 0.0
  %1593 = vmatprep.subr.mxu0 0.0
  %1594 = vmatpush2.msra.mxu0 0.0
  %1595 = vmatprep.mubr.f32.mxu0 0.0
  %1596 = vmatmul.mubr.f32.gmra.mxu0 %v1529
  %v1597 = vpop.f32.mrf.mxu0
  %v1598 = vadd.f32 %v1526, %v1597
  %v1599 = vpop.f32.mrf.mxu0
  %1600 = vdwg.mxu0
  %vm1601 = vcmask 12288
  %1602 = vst.msk [vmem:[%s10] sm:$0x1f] %vm1601, %v1598
  // Predicated region
  $region42: #{_cabnet_forward.1} parent=0 // pred_check
    _
  $region43: #{_cabnet_forward.1} parent=0 // pred_check_branch
    %1604 = sbr.rel (0) target = $region45
  $region44: #{_cabnet_forward.1} parent=0 // pred_region
    _
  $region45: #{_cabnet_forward.1} parent=0 // pred_fallthru
    _
  // Predicated region
  $region46: #{_cabnet_forward.1} parent=0 // pred_check
    _
  $region47: #{_cabnet_forward.1} parent=0 // pred_check_branch
    %1606 = sbr.rel (0) target = $region49
  $region48: #{_cabnet_forward.1} parent=0 // pred_region
    _
  $region49: #{_cabnet_forward.1} parent=0 // pred_fallthru
    _

</llo_original>
